<compile_context>
chip_gen: v6e
topology: v6e:2x2x1
jax: 0.10.0
libtpu: 0.0.40
codegen_flags: <defaults>
</compile_context>

<pallas_src>
import jax
import jax.numpy as jnp
from jax import lax
from jax.experimental import pallas as pl
from jax.experimental.pallas import tpu as pltpu


_NEG_SLOPE = 0.01            # nn.LeakyReLU() default negative_slope
_MIB = 1024 * 1024


def _leaky_relu(x):
    return jnp.where(x > 0, x, _NEG_SLOPE * x)


def _round_up(x, m):
    return ((x + m - 1) // m) * m


def _round_down(x, m):
    return (x // m) * m


def discriminator_kernel(x_ref, w1_ref, b1_ref, w2_ref, b2_ref, w3_ref, b3_ref,
                         out_ref, acc_ref):
    """Grid = (batch_tiles, k_tiles).

    x_ref  : (TILE_B, TILE_D) f32   streamed; cast to bf16 in-kernel
    w1_ref : (TILE_D, 512)    bf16  resident (k_tiles==1) or streamed over k
    b1_ref : (1, 512)         f32
    w2_ref : (512, 256)       bf16  resident (single-buffered)
    b2_ref : (1, 256)         f32
    w3_ref : (1, 256)         bf16
    b3_ref : (1,)             f32   SMEM scalar
    out_ref: (1, TILE_B)      f32   lane-dense output row
    acc_ref: (TILE_B, 512)    f32   layer-1 accumulator scratch
    """
    k = pl.program_id(1)
    nk = pl.num_programs(1)

    # Layer 1 partial product on the MXU (bf16 inputs, f32 accumulation).
    x = x_ref[...].astype(jnp.bfloat16)          # in-kernel cast, hidden under MXU
    partial = jnp.dot(x, w1_ref[...], preferred_element_type=jnp.float32)

    @pl.when(k == 0)
    def _():
        acc_ref[...] = partial

    @pl.when(k > 0)
    def _():
        acc_ref[...] += partial

    @pl.when(k == nk - 1)
    def _():
        # Linear(img_dim, 512) bias + LeakyReLU; Dropout(0.5) = identity (eval).
        h1 = _leaky_relu(acc_ref[...] + b1_ref[...])

        # Linear(512, 256) + LeakyReLU; Dropout(0.5) = identity (eval).
        h2 = jnp.dot(h1.astype(jnp.bfloat16), w2_ref[...],
                     preferred_element_type=jnp.float32)
        h2 = _leaky_relu(h2 + b2_ref[...])

        # Linear(256, 1) + Sigmoid, emitted lane-dense: contract w3 (1, 256)
        # against h2 (TILE_B, 256) on the 256 axis -> (1, TILE_B).
        logits = lax.dot_general(
            w3_ref[...], h2.astype(jnp.bfloat16),
            dimension_numbers=(((1,), (1,)), ((), ())),
            preferred_element_type=jnp.float32)
        out_ref[...] = jax.nn.sigmoid(logits + b3_ref[0])


def _vmem_capacity_bytes():
    try:
        info = pltpu.get_tpu_info()
        cap = getattr(info, "vmem_capacity_bytes", None)
        if cap:
            return int(cap)
    except Exception:
        pass
    return 64 * _MIB          # conservative (v7x per-core); v5e/v6e have 128 MiB


def _plan(n, d):
    """Pick (tile_b, tile_d, vmem_request) from the problem size and chip VMEM."""
    cap = _vmem_capacity_bytes()
    vmem_request = max(32 * _MIB, min(cap - 16 * _MIB, 100 * _MIB))
    budget = vmem_request - 8 * _MIB              # headroom for compiler scratch

    # w2 + biases + w3 (single/double-buffered, all tiny).
    small_resident = 512 * 256 * 2 + (512 + 256 + 256 + 8) * 4

    # Fast path: all of w1 stays VMEM-resident (single-buffered bf16).
    w1_resident = d * 512 * 2
    per_row = 2 * d * 4 + d * 2 + (512 + 256) * 4   # x f32 dbl-buf + bf16 cast + h1/h2
    avail = budget - small_resident - w1_resident
    if avail >= 128 * per_row:
        tile_d = d
    else:
        # K-tiled fallback for very large img_dim: stream w1 in (tile_d, 512) slabs.
        tile_d = 1024
        per_row = 2 * tile_d * 4 + tile_d * 2 + (512 + 256) * 4
        avail = budget - small_resident - 2 * tile_d * 512 * 2

    tile_b = max(128, min(2048, avail // per_row))
    tile_b = _round_down(tile_b, 128)
    if n >= 256:
        # >= 2 grid steps so the "parallel" batch axis can use both v7x cores.
        tile_b = min(tile_b, _round_up(pl.cdiv(n, 2), 128))
    if tile_b >= n:
        tile_b = n            # single full-batch block (block dim == array dim)
    return tile_b, tile_d, vmem_request


def _resident_spec(shape):
    """Constant-index BlockSpec, single-buffered when supported."""
    if hasattr(pl, "Buffered"):
        return pl.BlockSpec(shape, lambda i, k: (0, 0),
                            pipeline_mode=pl.Buffered(1))
    return pl.BlockSpec(shape, lambda i, k: (0, 0))


def discriminator_forward(img, params):
    """img: (N, C, H, W) float32. Returns (N, 1) float32 validity scores."""
    w1, b1, w2, b2, w3, b3 = params
    n = img.shape[0]
    x = img.reshape(n, -1)                        # NCHW flatten (matches .view)
    d = x.shape[1]

    tile_b, tile_d, vmem_request = _plan(n, d)
    d_pad = _round_up(d, tile_d)
    k_tiles = d_pad // tile_d
    num_b_tiles = pl.cdiv(n, tile_b)
    n_work = num_b_tiles * tile_b

    # One-time host-side bf16 cast of the (small) weight matrices only.
    w1b = w1.astype(jnp.bfloat16)
    w2b = w2.astype(jnp.bfloat16)
    w3b = w3.reshape(1, 256).astype(jnp.bfloat16)
    b1r = b1.reshape(1, 512).astype(jnp.float32)
    b2r = b2.reshape(1, 256).astype(jnp.float32)
    b3s = b3.reshape(-1).astype(jnp.float32)      # (1,) SMEM scalar

    if d_pad != d:
        # K-tiled path only: zero-pad the contracted axis so partial products
        # from the ragged last K block are exactly zero.
        x = jnp.pad(x, ((0, 0), (0, d_pad - d)))
        w1b = jnp.pad(w1b, ((0, d_pad - d), (0, 0)))

    if k_tiles == 1:
        w1_spec = _resident_spec((tile_d, 512))
    else:
        w1_spec = pl.BlockSpec((tile_d, 512), lambda i, k: (k, 0))

    cost = pl.CostEstimate(
        flops=2 * n_work * (d_pad * 512 + 512 * 256 + 256),
        transcendentals=n_work,
        bytes_accessed=(n_work * d_pad * 4 + d_pad * 512 * 2 + 512 * 256 * 2
                        + (512 + 256 + 256 + 1) * 4 + n_work * 4),
    )

    out = pl.pallas_call(
        discriminator_kernel,
        out_shape=jax.ShapeDtypeStruct((1, n_work), jnp.float32),
        grid=(num_b_tiles, k_tiles),
        in_specs=[
            pl.BlockSpec((tile_b, tile_d), lambda i, k: (i, k)),    # x: streamed f32
            w1_spec,                                                # w1
            pl.BlockSpec((1, 512), lambda i, k: (0, 0)),            # b1
            _resident_spec((512, 256)),                             # w2: resident
            pl.BlockSpec((1, 256), lambda i, k: (0, 0)),            # b2
            pl.BlockSpec((1, 256), lambda i, k: (0, 0)),            # w3 row (bf16)
            pl.BlockSpec(memory_space=pltpu.MemorySpace.SMEM),      # b3 scalar
        ],
        out_specs=pl.BlockSpec((1, tile_b), lambda i, k: (0, i)),   # lane-dense row
        scratch_shapes=[pltpu.VMEM((tile_b, 512), jnp.float32)],
        compiler_params=pltpu.CompilerParams(
            dimension_semantics=("parallel", "arbitrary"),
            vmem_limit_bytes=int(vmem_request),
        ),
        cost_estimate=cost,
    )(x, w1b, b1r, w2b, b2r, w3b, b3s)

    return out[0, :n].reshape(n, 1)


def init_params(key, img_dim):
    """Deterministic init mimicking PyTorch Linear: U(-1/sqrt(fan_in), +)."""
    dims = [(img_dim, 512), (512, 256), (256, 1)]
    params = []
    for fan_in, fan_out in dims:
        kw, kb, key = jax.random.split(key, 3)
        bound = 1.0 / (fan_in ** 0.5)
        # Stored as (in, out) so forward computes x @ W + b directly.
        w = jax.random.uniform(kw, (fan_in, fan_out), jnp.float32,
                               minval=-bound, maxval=bound)
        b = jax.random.uniform(kb, (1, fan_out), jnp.float32,
                               minval=-bound, maxval=bound)
        params.extend([w, b])
    return tuple(params)


def reference_forward(img, params):
    """Plain-JAX reference with the same bf16-input / f32-accum precision."""
    w1, b1, w2, b2, w3, b3 = params
    x = img.reshape(img.shape[0], -1)
    h1 = _leaky_relu(jnp.dot(x.astype(jnp.bfloat16), w1.astype(jnp.bfloat16),
                             preferred_element_type=jnp.float32) + b1)
    h2 = _leaky_relu(jnp.dot(h1.astype(jnp.bfloat16), w2.astype(jnp.bfloat16),
                             preferred_element_type=jnp.float32) + b2)
    logits = jnp.dot(h2.astype(jnp.bfloat16), w3.astype(jnp.bfloat16),
                     preferred_element_type=jnp.float32) + b3
    return jax.nn.sigmoid(logits)


if __name__ == "__main__":
    key = jax.random.PRNGKey(0)
    k_img, k_par = jax.random.split(key)

    # Small example: batch=2, channels=4, spatial=16 -> img_dim = 4*16*16 = 1024
    B, C, H, W = 2, 4, 16, 16
    img_dim = C * H * W

    img = jax.random.normal(k_img, (B, C, H, W), dtype=jnp.float32)
    params = init_params(k_par, img_dim)

    out = discriminator_forward(img, params)
    out = jax.block_until_ready(out)

    ref = reference_forward(img, params)
    assert out.shape == (B, 1)
    assert jnp.allclose(out, ref, atol=2e-3, rtol=2e-3), "mismatch vs reference"

    print("KERNEL_OK")
</pallas_src>

<mosaic_0001>
module attributes {stable_mosaic.version = 11 : i64} {
  func.func @discriminator_kernel(%arg0: i32, %arg1: i32, %arg2: memref<2x1024xf32, #tpu.memory_space<vmem>>, %arg3: memref<1024x512xbf16, #tpu.memory_space<vmem>>, %arg4: memref<1x512xf32, #tpu.memory_space<vmem>>, %arg5: memref<512x256xbf16, #tpu.memory_space<vmem>>, %arg6: memref<1x256xf32, #tpu.memory_space<vmem>>, %arg7: memref<1x256xbf16, #tpu.memory_space<vmem>>, %arg8: memref<1xf32, #tpu.memory_space<smem>>, %arg9: memref<1x2xf32, #tpu.memory_space<vmem>>, %arg10: memref<2x512xf32, #tpu.memory_space<vmem>>) attributes {dimension_semantics = [#tpu.dimension_semantics<parallel>, #tpu.dimension_semantics<arbitrary>], iteration_bounds = array<i64: 1, 1>, scalar_prefetch = 0 : i64, scratch_operands = 1 : i64, tpu.core_type = #tpu.core_type<tc>, window_params = [{transform_indices = @transform_0, window_bounds = array<i64: 2, 1024>}, {pipeline_mode = #tpu.pipeline_mode<synchronous>, transform_indices = @transform_1, window_bounds = array<i64: 1024, 512>}, {pipeline_mode = #tpu.pipeline_mode<synchronous>, transform_indices = @transform_2, window_bounds = array<i64: 1, 512>}, {pipeline_mode = #tpu.pipeline_mode<synchronous>, transform_indices = @transform_3, window_bounds = array<i64: 512, 256>}, {pipeline_mode = #tpu.pipeline_mode<synchronous>, transform_indices = @transform_4, window_bounds = array<i64: 1, 256>}, {pipeline_mode = #tpu.pipeline_mode<synchronous>, transform_indices = @transform_5, window_bounds = array<i64: 1, 256>}, {transform_indices = @transform_6, window_bounds = array<i64: 1>}, {transform_indices = @transform_7, window_bounds = array<i64: 1, 2>}]} {
    %c0 = arith.constant 0 : index
    %c0_0 = arith.constant 0 : index
    %0 = vector.load %arg2[%c0, %c0_0] : memref<2x1024xf32, #tpu.memory_space<vmem>>, vector<2x1024xf32>
    %1 = arith.truncf %0 : vector<2x1024xf32> to vector<2x1024xbf16>
    %c0_1 = arith.constant 0 : index
    %c0_2 = arith.constant 0 : index
    %2 = vector.load %arg3[%c0_1, %c0_2] : memref<1024x512xbf16, #tpu.memory_space<vmem>>, vector<1024x512xbf16>
    %cst = arith.constant dense<0.000000e+00> : vector<2x512xf32>
    %3 = tpu.matmul %1, %2, %cst {dimension_numbers = #tpu.dot_dimension_numbers<[1], [0], [0], [1], [0, 0, 1, 1], [], []>} : vector<2x1024xbf16>, vector<1024x512xbf16>, vector<2x512xf32> -> vector<2x512xf32>
    %c0_i32 = arith.constant 0 : i32
    %4 = arith.cmpi eq, %arg1, %c0_i32 : i32
    %5 = arith.extui %4 : i1 to i32
    %c0_i32_3 = arith.constant 0 : i32
    %6 = arith.cmpi ne, %5, %c0_i32_3 : i32
    scf.if %6 {
      %c0_8 = arith.constant 0 : index
      %c0_9 = arith.constant 0 : index
      %13 = vector.load %arg10[%c0_8, %c0_9] : memref<2x512xf32, #tpu.memory_space<vmem>>, vector<2x512xf32>
      tpu.vector_store %arg10[%c0_8, %c0_9], %3 {strides = array<i32>} : memref<2x512xf32, #tpu.memory_space<vmem>>, vector<2x512xf32>,
    } else {
    }
    %c0_i32_4 = arith.constant 0 : i32
    %7 = arith.cmpi sgt, %arg1, %c0_i32_4 : i32
    %8 = arith.extui %7 : i1 to i32
    %c0_i32_5 = arith.constant 0 : i32
    %9 = arith.cmpi ne, %8, %c0_i32_5 : i32
    scf.if %9 {
      %c0_8 = arith.constant 0 : index
      %c0_9 = arith.constant 0 : index
      %13 = vector.load %arg10[%c0_8, %c0_9] : memref<2x512xf32, #tpu.memory_space<vmem>>, vector<2x512xf32>
      %14 = arith.addf %13, %3 : vector<2x512xf32>
      %c0_10 = arith.constant 0 : index
      %c0_11 = arith.constant 0 : index
      %15 = vector.load %arg10[%c0_10, %c0_11] : memref<2x512xf32, #tpu.memory_space<vmem>>, vector<2x512xf32>
      tpu.vector_store %arg10[%c0_10, %c0_11], %14 {strides = array<i32>} : memref<2x512xf32, #tpu.memory_space<vmem>>, vector<2x512xf32>,
    } else {
    }
    %c0_i32_6 = arith.constant 0 : i32
    %10 = arith.cmpi eq, %arg1, %c0_i32_6 : i32
    %11 = arith.extui %10 : i1 to i32
    %c0_i32_7 = arith.constant 0 : i32
    %12 = arith.cmpi ne, %11, %c0_i32_7 : i32
    scf.if %12 {
      %c0_8 = arith.constant 0 : index
      %c0_9 = arith.constant 0 : index
      %13 = vector.load %arg10[%c0_8, %c0_9] : memref<2x512xf32, #tpu.memory_space<vmem>>, vector<2x512xf32>
      %c0_10 = arith.constant 0 : index
      %c0_11 = arith.constant 0 : index
      %14 = vector.load %arg4[%c0_10, %c0_11] : memref<1x512xf32, #tpu.memory_space<vmem>>, vector<1x512xf32>
      %15 = vector.broadcast %14 : vector<1x512xf32> to vector<2x512xf32>
      %16 = arith.addf %13, %15 : vector<2x512xf32>
      %cst_12 = arith.constant 0.000000e+00 : f32
      %17 = vector.broadcast %cst_12 : f32 to vector<2x512xf32>
      %18 = arith.cmpf ogt, %16, %17 : vector<2x512xf32>
      %cst_13 = arith.constant 0.00999999977 : f32
      %19 = vector.broadcast %cst_13 : f32 to vector<2x512xf32>
      %20 = arith.mulf %19, %16 : vector<2x512xf32>
      %21 = arith.select %18, %16, %20 : vector<2x512xi1>, vector<2x512xf32>
      %22 = arith.truncf %21 : vector<2x512xf32> to vector<2x512xbf16>
      %c0_14 = arith.constant 0 : index
      %c0_15 = arith.constant 0 : index
      %23 = vector.load %arg5[%c0_14, %c0_15] : memref<512x256xbf16, #tpu.memory_space<vmem>>, vector<512x256xbf16>
      %cst_16 = arith.constant dense<0.000000e+00> : vector<2x256xf32>
      %24 = tpu.matmul %22, %23, %cst_16 {dimension_numbers = #tpu.dot_dimension_numbers<[1], [0], [0], [1], [0, 0, 1, 1], [], []>} : vector<2x512xbf16>, vector<512x256xbf16>, vector<2x256xf32> -> vector<2x256xf32>
      %c0_17 = arith.constant 0 : index
      %c0_18 = arith.constant 0 : index
      %25 = vector.load %arg6[%c0_17, %c0_18] : memref<1x256xf32, #tpu.memory_space<vmem>>, vector<1x256xf32>
      %26 = vector.broadcast %25 : vector<1x256xf32> to vector<2x256xf32>
      %27 = arith.addf %24, %26 : vector<2x256xf32>
      %cst_19 = arith.constant 0.000000e+00 : f32
      %28 = vector.broadcast %cst_19 : f32 to vector<2x256xf32>
      %29 = arith.cmpf ogt, %27, %28 : vector<2x256xf32>
      %cst_20 = arith.constant 0.00999999977 : f32
      %30 = vector.broadcast %cst_20 : f32 to vector<2x256xf32>
      %31 = arith.mulf %30, %27 : vector<2x256xf32>
      %32 = arith.select %29, %27, %31 : vector<2x256xi1>, vector<2x256xf32>
      %c0_21 = arith.constant 0 : index
      %c0_22 = arith.constant 0 : index
      %33 = vector.load %arg7[%c0_21, %c0_22] : memref<1x256xbf16, #tpu.memory_space<vmem>>, vector<1x256xbf16>
      %34 = arith.truncf %32 : vector<2x256xf32> to vector<2x256xbf16>
      %cst_23 = arith.constant dense<0.000000e+00> : vector<1x2xf32>
      %35 = tpu.matmul %33, %34, %cst_23 {dimension_numbers = #tpu.dot_dimension_numbers<[1], [1], [0], [0], [0, 0, 1, 0], [], []>} : vector<1x256xbf16>, vector<2x256xbf16>, vector<1x2xf32> -> vector<1x2xf32>
      %c0_24 = arith.constant 0 : index
      %36 = memref.load %arg8[%c0_24] : memref<1xf32, #tpu.memory_space<smem>>
      %37 = vector.broadcast %36 : f32 to vector<1x2xf32>
      %38 = arith.addf %35, %37 : vector<1x2xf32>
      %39 = arith.negf %38 : vector<1x2xf32>
      %40 = math.exp %39 : vector<1x2xf32>
      %cst_25 = arith.constant 1.000000e+00 : f32
      %41 = vector.broadcast %cst_25 : f32 to vector<1x2xf32>
      %42 = arith.addf %41, %40 : vector<1x2xf32>
      %43 = arith.divf %41, %42 : vector<1x2xf32>
      %c0_26 = arith.constant 0 : index
      %c0_27 = arith.constant 0 : index
      %44 = vector.load %arg9[%c0_26, %c0_27] : memref<1x2xf32, #tpu.memory_space<vmem>>, vector<1x2xf32>
      tpu.vector_store %arg9[%c0_26, %c0_27], %43 {strides = array<i32>} : memref<1x2xf32, #tpu.memory_space<vmem>>, vector<1x2xf32>,
    } else {
    }
    return
  }
  func.func @transform_0(%arg0: i32, %arg1: i32) -> (i32, i32) {
    %c0_i32 = arith.constant 0 : i32
    return %arg0, %arg1 : i32, i32
  }
  func.func @transform_1(%arg0: i32, %arg1: i32) -> (i32, i32) {
    %c0_i32 = arith.constant 0 : i32
    %c0_i32_0 = arith.constant 0 : i32
    %c0_i32_1 = arith.constant 0 : i32
    return %c0_i32, %c0_i32_0 : i32, i32
  }
  func.func @transform_2(%arg0: i32, %arg1: i32) -> (i32, i32) {
    %c0_i32 = arith.constant 0 : i32
    %c0_i32_0 = arith.constant 0 : i32
    %c0_i32_1 = arith.constant 0 : i32
    return %c0_i32, %c0_i32_0 : i32, i32
  }
  func.func @transform_3(%arg0: i32, %arg1: i32) -> (i32, i32) {
    %c0_i32 = arith.constant 0 : i32
    %c0_i32_0 = arith.constant 0 : i32
    %c0_i32_1 = arith.constant 0 : i32
    return %c0_i32, %c0_i32_0 : i32, i32
  }
  func.func @transform_4(%arg0: i32, %arg1: i32) -> (i32, i32) {
    %c0_i32 = arith.constant 0 : i32
    %c0_i32_0 = arith.constant 0 : i32
    %c0_i32_1 = arith.constant 0 : i32
    return %c0_i32, %c0_i32_0 : i32, i32
  }
  func.func @transform_5(%arg0: i32, %arg1: i32) -> (i32, i32) {
    %c0_i32 = arith.constant 0 : i32
    %c0_i32_0 = arith.constant 0 : i32
    %c0_i32_1 = arith.constant 0 : i32
    return %c0_i32, %c0_i32_0 : i32, i32
  }
  func.func @transform_6(%arg0: i32, %arg1: i32) -> i32 {
    %c0_i32 = arith.constant 0 : i32
    %c0_i32_0 = arith.constant 0 : i32
    return %c0_i32 : i32
  }
  func.func @transform_7(%arg0: i32, %arg1: i32) -> (i32, i32) {
    %c0_i32 = arith.constant 0 : i32
    %c0_i32_0 = arith.constant 0 : i32
    return %c0_i32, %arg0 : i32, i32
  }
}

</mosaic_0001>

<llo_original>
// kernel: tpu_custom_call.1
$region0: #{tpu_custom_call.1}
  #allocation0 [shape = 'u32[]', space=smem, size = 0x4, offset = 0x4, fixed_abs, tag = 'smem constant byte address 0x4 - core index']
  #allocation1 [shape = 'u32[144,128]{1,0:T(1,128)}', space=vmem, size = 0x12000, scoped, tag = 'internal scratch']
  #allocation2 [shape = 'f32[2,512]{1,0:T(2,128)}', space=vmem, size = 0x1000, scoped, tag = 'scratch operand']
  #allocation3 [shape = 'f32[1]{0:T(128)S(6)}', space=smem, size = 0x200, scoped, tag = 'scoped memory for tpu_custom_call.1']
  %s0 = inlined_call_operand.hbm [shape: f32[2,1024], index: 0, kind: input, shape index: {}]
  %s1 = inlined_call_operand.hbm [shape: bf16[1024,512], index: 1, kind: input, shape index: {}]
  %s2 = inlined_call_operand.vmem [shape: f32[1,512], index: 2, kind: input, shape index: {}]
  %s3 = inlined_call_operand.hbm [shape: bf16[512,256], index: 3, kind: input, shape index: {}]
  %s4 = inlined_call_operand.vmem [shape: f32[1,256], index: 4, kind: input, shape index: {}]
  %s5 = inlined_call_operand.vmem [shape: bf16[1,256], index: 5, kind: input, shape index: {}]
  %s6 = inlined_call_operand.<no memory space> [shape: f32[1], index: 6, kind: input, shape index: {}]
  %s7 = inlined_call_operand.hbm [shape: f32[1,2], index: 7, kind: output, shape index: {}]
  %s8 = sld [smem:[#allocation0]]
  $region62: #{tpu_custom_call.1} parent=0
    _
  %s10 = ssub.s32 1, %s8
  %s11 = scalar_select 0, %s10, %s8
  %12 = sst [smem:[#allocation3]] %s6
  $region1: #{tpu_custom_call.1} parent=0
    #allocation4 [shape = 'u8[8192]{0}', space=vmem, size = 0x2000, scoped, tag = 'input window, operand 0, single buffered']
    #allocation5 [shape = 's32[1]{0}', space=sflag, size = 0x4, scoped, tag = 'scoped memory for tpu_custom_call.1']
    #allocation6 [shape = 's32[1]{0}', space=sflag, size = 0x4, scoped, tag = 'scoped memory for tpu_custom_call.1']
    #allocation7 [shape = 'u8[1048576]{0}', space=vmem, size = 0x100000, scoped, tag = 'input window, operand 1, single buffered']
    #allocation8 [shape = 's32[1]{0}', space=sflag, size = 0x4, scoped, tag = 'scoped memory for tpu_custom_call.1']
    #allocation9 [shape = 'u8[262144]{0}', space=vmem, size = 0x40000, scoped, tag = 'input window, operand 3, single buffered']
    #allocation10 [shape = 'u8[512]{0}', space=vmem, size = 0x400, scoped, tag = 'output window, operand 0, single buffered']
    %13 = vsyncpa [#allocation5], 0
    %14 = vsyncpa [#allocation8], 0
    %15 = vsyncpa [#allocation6], 0
    // Predicated region
    $region2: #{tpu_custom_call.1} parent=1 // pred_check
      _
    $region3: #{tpu_custom_call.1} parent=1 // pred_check_branch
      %17 = sbr.rel (0) target = $region5
    $region4: #{tpu_custom_call.1} parent=1 // pred_region
      %s19 = ssub.s32 256, 256
      %20 = vsyncadd [#allocation5], %s19
      %s22 = sshll.u32 [#allocation4], 4
      %s23 = int_to_ptr.vmem [resolvable:$true] %s22
      %25 = dma.hbm_to_vmem [thread:$0]  %s0, 256, %s23, [#allocation5]
    $region5: #{tpu_custom_call.1} parent=1 // pred_fallthru
      _
    // Predicated region
    $region6: #{tpu_custom_call.1} parent=1 // pred_check
      _
    $region7: #{tpu_custom_call.1} parent=1 // pred_check_branch
      %27 = sbr.rel (0) target = $region9
    $region8: #{tpu_custom_call.1} parent=1 // pred_region
      %s29 = ssub.s32 32768, 32768
      %30 = vsyncadd [#allocation8], %s29
      %s31 = sshll.u32 [#allocation7], 4
      %s32 = int_to_ptr.vmem [resolvable:$true] %s31
      %37 = dma.hbm_to_vmem [thread:$0]  %s1, 32768, %s32, [#allocation8], 256, 256, 16
    $region9: #{tpu_custom_call.1} parent=1 // pred_fallthru
      _
    // Predicated region
    $region10: #{tpu_custom_call.1} parent=1 // pred_check
      _
    $region11: #{tpu_custom_call.1} parent=1 // pred_check_branch
      %39 = sbr.rel (0) target = $region13
    $region12: #{tpu_custom_call.1} parent=1 // pred_region
      _
    $region13: #{tpu_custom_call.1} parent=1 // pred_fallthru
      _
    // Predicated region
    $region14: #{tpu_custom_call.1} parent=1 // pred_check
      _
    $region15: #{tpu_custom_call.1} parent=1 // pred_check_branch
      %41 = sbr.rel (0) target = $region17
    $region16: #{tpu_custom_call.1} parent=1 // pred_region
      %s43 = ssub.s32 8192, 8192
      %44 = vsyncadd [#allocation8], %s43
      %s45 = sshll.u32 [#allocation9], 4
      %s46 = int_to_ptr.vmem [resolvable:$true] %s45
      %51 = dma.hbm_to_vmem [thread:$0]  %s3, 8192, %s46, [#allocation8], 128, 128, 8
    $region17: #{tpu_custom_call.1} parent=1 // pred_fallthru
      _
    // Predicated region
    $region18: #{tpu_custom_call.1} parent=1 // pred_check
      _
    $region19: #{tpu_custom_call.1} parent=1 // pred_check_branch
      %53 = sbr.rel (0) target = $region21
    $region20: #{tpu_custom_call.1} parent=1 // pred_region
      _
    $region21: #{tpu_custom_call.1} parent=1 // pred_fallthru
      _
    // Predicated region
    $region22: #{tpu_custom_call.1} parent=1 // pred_check
      _
    $region23: #{tpu_custom_call.1} parent=1 // pred_check_branch
      %55 = sbr.rel (0) target = $region25
    $region24: #{tpu_custom_call.1} parent=1 // pred_region
      _
    $region25: #{tpu_custom_call.1} parent=1 // pred_fallthru
      _
    // Predicated region
    $region26: #{tpu_custom_call.1} parent=1 // pred_check
      _
    $region27: #{tpu_custom_call.1} parent=1 // pred_check_branch
      %57 = sbr.rel (0) target = $region29
    $region28: #{tpu_custom_call.1} parent=1 // pred_region
      _
    $region29: #{tpu_custom_call.1} parent=1 // pred_fallthru
      _
    // Predicated region
    $region30: #{tpu_custom_call.1} parent=1 // pred_check
      _
    $region31: #{tpu_custom_call.1} parent=1 // pred_check_branch
      %59 = sbr.rel (0) target = $region33
    $region32: #{tpu_custom_call.1} parent=1 // pred_region
      %60 = dma.done [#allocation5], 256
    $region33: #{tpu_custom_call.1} parent=1 // pred_fallthru
      _
    // Predicated region
    $region34: #{tpu_custom_call.1} parent=1 // pred_check
      _
    $region35: #{tpu_custom_call.1} parent=1 // pred_check_branch
      %62 = sbr.rel (0) target = $region37
    $region36: #{tpu_custom_call.1} parent=1 // pred_region
      %63 = dma.done [#allocation8], 32768
    $region37: #{tpu_custom_call.1} parent=1 // pred_fallthru
      _
    // Predicated region
    $region38: #{tpu_custom_call.1} parent=1 // pred_check
      _
    $region39: #{tpu_custom_call.1} parent=1 // pred_check_branch
      %65 = sbr.rel (0) target = $region41
    $region40: #{tpu_custom_call.1} parent=1 // pred_region
      %66 = dma.done [#allocation8], 8192
    $region41: #{tpu_custom_call.1} parent=1 // pred_fallthru
      _
    %v68 = vld [vmem:[#allocation4] sm:$0xff]
    %v69 = vld [vmem:[#allocation4 + $0x8] sm:$0xff]
    %v72 = vcombine.high %v68, %v68
    %v74 = vunpack.c.l.s4 1983009808
    %v75 = vunpack.c.0.s8 %v74
    %v76 = vlaneseq
    %v77 = vshrl.u32 %v76, 7
    %v78 = vsub.s32 %v75, %v77
    %v79 = vrot.slane %v68, %v78
    %v81 = vunpack.c.l.s4 1983009808
    %v82 = vunpack.c.0.s8 %v81
    %v83 = vlaneseq
    %v84 = vshrl.u32 %v83, 7
    %v85 = vsub.s32 %v82, %v84
    %v86 = vrot.slane %v72, %v85
    %v87 = vcombine.high %v79, %v79
    %v88 = vcombine.high %v86, %v86
    %v89 = vcombine.high %v69, %v69
    %v91 = vunpack.c.l.s4 1983009808
    %v92 = vunpack.c.0.s8 %v91
    %v93 = vlaneseq
    %v94 = vshrl.u32 %v93, 7
    %v95 = vsub.s32 %v92, %v94
    %v96 = vrot.slane %v69, %v95
    %v98 = vunpack.c.l.s4 1983009808
    %v99 = vunpack.c.0.s8 %v98
    %v100 = vlaneseq
    %v101 = vshrl.u32 %v100, 7
    %v102 = vsub.s32 %v99, %v101
    %v103 = vrot.slane %v89, %v102
    %v104 = vcombine.high %v96, %v96
    %v105 = vcombine.high %v103, %v103
    %v114 = vpack.c.bf16 %v79, %v79
    %v115 = vpack.c.bf16 %v87, %v87
    %v116 = vpack.c.bf16 %v86, %v86
    %v117 = vpack.c.bf16 %v88, %v88
    %v118 = vpack.c.bf16 %v96, %v96
    %v119 = vpack.c.bf16 %v104, %v104
    %v120 = vpack.c.bf16 %v103, %v103
    %v121 = vpack.c.bf16 %v105, %v105
    %v122 = vld [vmem:[#allocation7] sm:$0xff]
    %v123 = vld [vmem:[#allocation7 + $0x8] sm:$0xff]
    %v124 = vld [vmem:[#allocation7 + $0x10] sm:$0xff]
    %v125 = vld [vmem:[#allocation7 + $0x18] sm:$0xff]
    %v126 = vld [vmem:[#allocation7 + $0x20] sm:$0xff]
    %v127 = vld [vmem:[#allocation7 + $0x28] sm:$0xff]
    %v128 = vld [vmem:[#allocation7 + $0x30] sm:$0xff]
    %v129 = vld [vmem:[#allocation7 + $0x38] sm:$0xff]
    %v130 = vld [vmem:[#allocation7 + $0x40] sm:$0xff]
    %v131 = vld [vmem:[#allocation7 + $0x48] sm:$0xff]
    %v132 = vld [vmem:[#allocation7 + $0x50] sm:$0xff]
    %v133 = vld [vmem:[#allocation7 + $0x58] sm:$0xff]
    %v134 = vld [vmem:[#allocation7 + $0x60] sm:$0xff]
    %v135 = vld [vmem:[#allocation7 + $0x68] sm:$0xff]
    %v136 = vld [vmem:[#allocation7 + $0x70] sm:$0xff]
    %v137 = vld [vmem:[#allocation7 + $0x78] sm:$0xff]
    %v138 = vld [vmem:[#allocation7 + $0x80] sm:$0xff]
    %v139 = vld [vmem:[#allocation7 + $0x88] sm:$0xff]
    %v140 = vld [vmem:[#allocation7 + $0x90] sm:$0xff]
    %v141 = vld [vmem:[#allocation7 + $0x98] sm:$0xff]
    %v142 = vld [vmem:[#allocation7 + $0xa0] sm:$0xff]
    %v143 = vld [vmem:[#allocation7 + $0xa8] sm:$0xff]
    %v144 = vld [vmem:[#allocation7 + $0xb0] sm:$0xff]
    %v145 = vld [vmem:[#allocation7 + $0xb8] sm:$0xff]
    %v146 = vld [vmem:[#allocation7 + $0xc0] sm:$0xff]
    %v147 = vld [vmem:[#allocation7 + $0xc8] sm:$0xff]
    %v148 = vld [vmem:[#allocation7 + $0xd0] sm:$0xff]
    %v149 = vld [vmem:[#allocation7 + $0xd8] sm:$0xff]
    %v150 = vld [vmem:[#allocation7 + $0xe0] sm:$0xff]
    %v151 = vld [vmem:[#allocation7 + $0xe8] sm:$0xff]
    %v152 = vld [vmem:[#allocation7 + $0xf0] sm:$0xff]
    %v153 = vld [vmem:[#allocation7 + $0xf8] sm:$0xff]
    %v154 = vld [vmem:[#allocation7 + $0x100] sm:$0xff]
    %v155 = vld [vmem:[#allocation7 + $0x108] sm:$0xff]
    %v156 = vld [vmem:[#allocation7 + $0x110] sm:$0xff]
    %v157 = vld [vmem:[#allocation7 + $0x118] sm:$0xff]
    %v158 = vld [vmem:[#allocation7 + $0x120] sm:$0xff]
    %v159 = vld [vmem:[#allocation7 + $0x128] sm:$0xff]
    %v160 = vld [vmem:[#allocation7 + $0x130] sm:$0xff]
    %v161 = vld [vmem:[#allocation7 + $0x138] sm:$0xff]
    %v162 = vld [vmem:[#allocation7 + $0x140] sm:$0xff]
    %v163 = vld [vmem:[#allocation7 + $0x148] sm:$0xff]
    %v164 = vld [vmem:[#allocation7 + $0x150] sm:$0xff]
    %v165 = vld [vmem:[#allocation7 + $0x158] sm:$0xff]
    %v166 = vld [vmem:[#allocation7 + $0x160] sm:$0xff]
    %v167 = vld [vmem:[#allocation7 + $0x168] sm:$0xff]
    %v168 = vld [vmem:[#allocation7 + $0x170] sm:$0xff]
    %v169 = vld [vmem:[#allocation7 + $0x178] sm:$0xff]
    %v170 = vld [vmem:[#allocation7 + $0x180] sm:$0xff]
    %v171 = vld [vmem:[#allocation7 + $0x188] sm:$0xff]
    %v172 = vld [vmem:[#allocation7 + $0x190] sm:$0xff]
    %v173 = vld [vmem:[#allocation7 + $0x198] sm:$0xff]
    %v174 = vld [vmem:[#allocation7 + $0x1a0] sm:$0xff]
    %v175 = vld [vmem:[#allocation7 + $0x1a8] sm:$0xff]
    %v176 = vld [vmem:[#allocation7 + $0x1b0] sm:$0xff]
    %v177 = vld [vmem:[#allocation7 + $0x1b8] sm:$0xff]
    %v178 = vld [vmem:[#allocation7 + $0x1c0] sm:$0xff]
    %v179 = vld [vmem:[#allocation7 + $0x1c8] sm:$0xff]
    %v180 = vld [vmem:[#allocation7 + $0x1d0] sm:$0xff]
    %v181 = vld [vmem:[#allocation7 + $0x1d8] sm:$0xff]
    %v182 = vld [vmem:[#allocation7 + $0x1e0] sm:$0xff]
    %v183 = vld [vmem:[#allocation7 + $0x1e8] sm:$0xff]
    %v184 = vld [vmem:[#allocation7 + $0x1f0] sm:$0xff]
    %v185 = vld [vmem:[#allocation7 + $0x1f8] sm:$0xff]
    %v186 = vld [vmem:[#allocation7 + $0x200] sm:$0xff]
    %v187 = vld [vmem:[#allocation7 + $0x208] sm:$0xff]
    %v188 = vld [vmem:[#allocation7 + $0x210] sm:$0xff]
    %v189 = vld [vmem:[#allocation7 + $0x218] sm:$0xff]
    %v190 = vld [vmem:[#allocation7 + $0x220] sm:$0xff]
    %v191 = vld [vmem:[#allocation7 + $0x228] sm:$0xff]
    %v192 = vld [vmem:[#allocation7 + $0x230] sm:$0xff]
    %v193 = vld [vmem:[#allocation7 + $0x238] sm:$0xff]
    %v194 = vld [vmem:[#allocation7 + $0x240] sm:$0xff]
    %v195 = vld [vmem:[#allocation7 + $0x248] sm:$0xff]
    %v196 = vld [vmem:[#allocation7 + $0x250] sm:$0xff]
    %v197 = vld [vmem:[#allocation7 + $0x258] sm:$0xff]
    %v198 = vld [vmem:[#allocation7 + $0x260] sm:$0xff]
    %v199 = vld [vmem:[#allocation7 + $0x268] sm:$0xff]
    %v200 = vld [vmem:[#allocation7 + $0x270] sm:$0xff]
    %v201 = vld [vmem:[#allocation7 + $0x278] sm:$0xff]
    %v202 = vld [vmem:[#allocation7 + $0x280] sm:$0xff]
    %v203 = vld [vmem:[#allocation7 + $0x288] sm:$0xff]
    %v204 = vld [vmem:[#allocation7 + $0x290] sm:$0xff]
    %v205 = vld [vmem:[#allocation7 + $0x298] sm:$0xff]
    %v206 = vld [vmem:[#allocation7 + $0x2a0] sm:$0xff]
    %v207 = vld [vmem:[#allocation7 + $0x2a8] sm:$0xff]
    %v208 = vld [vmem:[#allocation7 + $0x2b0] sm:$0xff]
    %v209 = vld [vmem:[#allocation7 + $0x2b8] sm:$0xff]
    %v210 = vld [vmem:[#allocation7 + $0x2c0] sm:$0xff]
    %v211 = vld [vmem:[#allocation7 + $0x2c8] sm:$0xff]
    %v212 = vld [vmem:[#allocation7 + $0x2d0] sm:$0xff]
    %v213 = vld [vmem:[#allocation7 + $0x2d8] sm:$0xff]
    %v214 = vld [vmem:[#allocation7 + $0x2e0] sm:$0xff]
    %v215 = vld [vmem:[#allocation7 + $0x2e8] sm:$0xff]
    %v216 = vld [vmem:[#allocation7 + $0x2f0] sm:$0xff]
    %v217 = vld [vmem:[#allocation7 + $0x2f8] sm:$0xff]
    %v218 = vld [vmem:[#allocation7 + $0x300] sm:$0xff]
    %v219 = vld [vmem:[#allocation7 + $0x308] sm:$0xff]
    %v220 = vld [vmem:[#allocation7 + $0x310] sm:$0xff]
    %v221 = vld [vmem:[#allocation7 + $0x318] sm:$0xff]
    %v222 = vld [vmem:[#allocation7 + $0x320] sm:$0xff]
    %v223 = vld [vmem:[#allocation7 + $0x328] sm:$0xff]
    %v224 = vld [vmem:[#allocation7 + $0x330] sm:$0xff]
    %v225 = vld [vmem:[#allocation7 + $0x338] sm:$0xff]
    %v226 = vld [vmem:[#allocation7 + $0x340] sm:$0xff]
    %v227 = vld [vmem:[#allocation7 + $0x348] sm:$0xff]
    %v228 = vld [vmem:[#allocation7 + $0x350] sm:$0xff]
    %v229 = vld [vmem:[#allocation7 + $0x358] sm:$0xff]
    %v230 = vld [vmem:[#allocation7 + $0x360] sm:$0xff]
    %v231 = vld [vmem:[#allocation7 + $0x368] sm:$0xff]
    %v232 = vld [vmem:[#allocation7 + $0x370] sm:$0xff]
    %v233 = vld [vmem:[#allocation7 + $0x378] sm:$0xff]
    %v234 = vld [vmem:[#allocation7 + $0x380] sm:$0xff]
    %v235 = vld [vmem:[#allocation7 + $0x388] sm:$0xff]
    %v236 = vld [vmem:[#allocation7 + $0x390] sm:$0xff]
    %v237 = vld [vmem:[#allocation7 + $0x398] sm:$0xff]
    %v238 = vld [vmem:[#allocation7 + $0x3a0] sm:$0xff]
    %v239 = vld [vmem:[#allocation7 + $0x3a8] sm:$0xff]
    %v240 = vld [vmem:[#allocation7 + $0x3b0] sm:$0xff]
    %v241 = vld [vmem:[#allocation7 + $0x3b8] sm:$0xff]
    %v242 = vld [vmem:[#allocation7 + $0x3c0] sm:$0xff]
    %v243 = vld [vmem:[#allocation7 + $0x3c8] sm:$0xff]
    %v244 = vld [vmem:[#allocation7 + $0x3d0] sm:$0xff]
    %v245 = vld [vmem:[#allocation7 + $0x3d8] sm:$0xff]
    %v246 = vld [vmem:[#allocation7 + $0x3e0] sm:$0xff]
    %v247 = vld [vmem:[#allocation7 + $0x3e8] sm:$0xff]
    %v248 = vld [vmem:[#allocation7 + $0x3f0] sm:$0xff]
    %v249 = vld [vmem:[#allocation7 + $0x3f8] sm:$0xff]
    %v250 = vld [vmem:[#allocation7 + $0x400] sm:$0xff]
    %v251 = vld [vmem:[#allocation7 + $0x408] sm:$0xff]
    %v252 = vld [vmem:[#allocation7 + $0x410] sm:$0xff]
    %v253 = vld [vmem:[#allocation7 + $0x418] sm:$0xff]
    %v254 = vld [vmem:[#allocation7 + $0x420] sm:$0xff]
    %v255 = vld [vmem:[#allocation7 + $0x428] sm:$0xff]
    %v256 = vld [vmem:[#allocation7 + $0x430] sm:$0xff]
    %v257 = vld [vmem:[#allocation7 + $0x438] sm:$0xff]
    %v258 = vld [vmem:[#allocation7 + $0x440] sm:$0xff]
    %v259 = vld [vmem:[#allocation7 + $0x448] sm:$0xff]
    %v260 = vld [vmem:[#allocation7 + $0x450] sm:$0xff]
    %v261 = vld [vmem:[#allocation7 + $0x458] sm:$0xff]
    %v262 = vld [vmem:[#allocation7 + $0x460] sm:$0xff]
    %v263 = vld [vmem:[#allocation7 + $0x468] sm:$0xff]
    %v264 = vld [vmem:[#allocation7 + $0x470] sm:$0xff]
    %v265 = vld [vmem:[#allocation7 + $0x478] sm:$0xff]
    %v266 = vld [vmem:[#allocation7 + $0x480] sm:$0xff]
    %v267 = vld [vmem:[#allocation7 + $0x488] sm:$0xff]
    %v268 = vld [vmem:[#allocation7 + $0x490] sm:$0xff]
    %v269 = vld [vmem:[#allocation7 + $0x498] sm:$0xff]
    %v270 = vld [vmem:[#allocation7 + $0x4a0] sm:$0xff]
    %v271 = vld [vmem:[#allocation7 + $0x4a8] sm:$0xff]
    %v272 = vld [vmem:[#allocation7 + $0x4b0] sm:$0xff]
    %v273 = vld [vmem:[#allocation7 + $0x4b8] sm:$0xff]
    %v274 = vld [vmem:[#allocation7 + $0x4c0] sm:$0xff]
    %v275 = vld [vmem:[#allocation7 + $0x4c8] sm:$0xff]
    %v276 = vld [vmem:[#allocation7 + $0x4d0] sm:$0xff]
    %v277 = vld [vmem:[#allocation7 + $0x4d8] sm:$0xff]
    %v278 = vld [vmem:[#allocation7 + $0x4e0] sm:$0xff]
    %v279 = vld [vmem:[#allocation7 + $0x4e8] sm:$0xff]
    %v280 = vld [vmem:[#allocation7 + $0x4f0] sm:$0xff]
    %v281 = vld [vmem:[#allocation7 + $0x4f8] sm:$0xff]
    %v282 = vld [vmem:[#allocation7 + $0x500] sm:$0xff]
    %v283 = vld [vmem:[#allocation7 + $0x508] sm:$0xff]
    %v284 = vld [vmem:[#allocation7 + $0x510] sm:$0xff]
    %v285 = vld [vmem:[#allocation7 + $0x518] sm:$0xff]
    %v286 = vld [vmem:[#allocation7 + $0x520] sm:$0xff]
    %v287 = vld [vmem:[#allocation7 + $0x528] sm:$0xff]
    %v288 = vld [vmem:[#allocation7 + $0x530] sm:$0xff]
    %v289 = vld [vmem:[#allocation7 + $0x538] sm:$0xff]
    %v290 = vld [vmem:[#allocation7 + $0x540] sm:$0xff]
    %v291 = vld [vmem:[#allocation7 + $0x548] sm:$0xff]
    %v292 = vld [vmem:[#allocation7 + $0x550] sm:$0xff]
    %v293 = vld [vmem:[#allocation7 + $0x558] sm:$0xff]
    %v294 = vld [vmem:[#allocation7 + $0x560] sm:$0xff]
    %v295 = vld [vmem:[#allocation7 + $0x568] sm:$0xff]
    %v296 = vld [vmem:[#allocation7 + $0x570] sm:$0xff]
    %v297 = vld [vmem:[#allocation7 + $0x578] sm:$0xff]
    %v298 = vld [vmem:[#allocation7 + $0x580] sm:$0xff]
    %v299 = vld [vmem:[#allocation7 + $0x588] sm:$0xff]
    %v300 = vld [vmem:[#allocation7 + $0x590] sm:$0xff]
    %v301 = vld [vmem:[#allocation7 + $0x598] sm:$0xff]
    %v302 = vld [vmem:[#allocation7 + $0x5a0] sm:$0xff]
    %v303 = vld [vmem:[#allocation7 + $0x5a8] sm:$0xff]
    %v304 = vld [vmem:[#allocation7 + $0x5b0] sm:$0xff]
    %v305 = vld [vmem:[#allocation7 + $0x5b8] sm:$0xff]
    %v306 = vld [vmem:[#allocation7 + $0x5c0] sm:$0xff]
    %v307 = vld [vmem:[#allocation7 + $0x5c8] sm:$0xff]
    %v308 = vld [vmem:[#allocation7 + $0x5d0] sm:$0xff]
    %v309 = vld [vmem:[#allocation7 + $0x5d8] sm:$0xff]
    %v310 = vld [vmem:[#allocation7 + $0x5e0] sm:$0xff]
    %v311 = vld [vmem:[#allocation7 + $0x5e8] sm:$0xff]
    %v312 = vld [vmem:[#allocation7 + $0x5f0] sm:$0xff]
    %v313 = vld [vmem:[#allocation7 + $0x5f8] sm:$0xff]
    %v314 = vld [vmem:[#allocation7 + $0x600] sm:$0xff]
    %v315 = vld [vmem:[#allocation7 + $0x608] sm:$0xff]
    %v316 = vld [vmem:[#allocation7 + $0x610] sm:$0xff]
    %v317 = vld [vmem:[#allocation7 + $0x618] sm:$0xff]
    %v318 = vld [vmem:[#allocation7 + $0x620] sm:$0xff]
    %v319 = vld [vmem:[#allocation7 + $0x628] sm:$0xff]
    %v320 = vld [vmem:[#allocation7 + $0x630] sm:$0xff]
    %v321 = vld [vmem:[#allocation7 + $0x638] sm:$0xff]
    %v322 = vld [vmem:[#allocation7 + $0x640] sm:$0xff]
    %v323 = vld [vmem:[#allocation7 + $0x648] sm:$0xff]
    %v324 = vld [vmem:[#allocation7 + $0x650] sm:$0xff]
    %v325 = vld [vmem:[#allocation7 + $0x658] sm:$0xff]
    %v326 = vld [vmem:[#allocation7 + $0x660] sm:$0xff]
    %v327 = vld [vmem:[#allocation7 + $0x668] sm:$0xff]
    %v328 = vld [vmem:[#allocation7 + $0x670] sm:$0xff]
    %v329 = vld [vmem:[#allocation7 + $0x678] sm:$0xff]
    %v330 = vld [vmem:[#allocation7 + $0x680] sm:$0xff]
    %v331 = vld [vmem:[#allocation7 + $0x688] sm:$0xff]
    %v332 = vld [vmem:[#allocation7 + $0x690] sm:$0xff]
    %v333 = vld [vmem:[#allocation7 + $0x698] sm:$0xff]
    %v334 = vld [vmem:[#allocation7 + $0x6a0] sm:$0xff]
    %v335 = vld [vmem:[#allocation7 + $0x6a8] sm:$0xff]
    %v336 = vld [vmem:[#allocation7 + $0x6b0] sm:$0xff]
    %v337 = vld [vmem:[#allocation7 + $0x6b8] sm:$0xff]
    %v338 = vld [vmem:[#allocation7 + $0x6c0] sm:$0xff]
    %v339 = vld [vmem:[#allocation7 + $0x6c8] sm:$0xff]
    %v340 = vld [vmem:[#allocation7 + $0x6d0] sm:$0xff]
    %v341 = vld [vmem:[#allocation7 + $0x6d8] sm:$0xff]
    %v342 = vld [vmem:[#allocation7 + $0x6e0] sm:$0xff]
    %v343 = vld [vmem:[#allocation7 + $0x6e8] sm:$0xff]
    %v344 = vld [vmem:[#allocation7 + $0x6f0] sm:$0xff]
    %v345 = vld [vmem:[#allocation7 + $0x6f8] sm:$0xff]
    %v346 = vld [vmem:[#allocation7 + $0x700] sm:$0xff]
    %v347 = vld [vmem:[#allocation7 + $0x708] sm:$0xff]
    %v348 = vld [vmem:[#allocation7 + $0x710] sm:$0xff]
    %v349 = vld [vmem:[#allocation7 + $0x718] sm:$0xff]
    %v350 = vld [vmem:[#allocation7 + $0x720] sm:$0xff]
    %v351 = vld [vmem:[#allocation7 + $0x728] sm:$0xff]
    %v352 = vld [vmem:[#allocation7 + $0x730] sm:$0xff]
    %v353 = vld [vmem:[#allocation7 + $0x738] sm:$0xff]
    %v354 = vld [vmem:[#allocation7 + $0x740] sm:$0xff]
    %v355 = vld [vmem:[#allocation7 + $0x748] sm:$0xff]
    %v356 = vld [vmem:[#allocation7 + $0x750] sm:$0xff]
    %v357 = vld [vmem:[#allocation7 + $0x758] sm:$0xff]
    %v358 = vld [vmem:[#allocation7 + $0x760] sm:$0xff]
    %v359 = vld [vmem:[#allocation7 + $0x768] sm:$0xff]
    %v360 = vld [vmem:[#allocation7 + $0x770] sm:$0xff]
    %v361 = vld [vmem:[#allocation7 + $0x778] sm:$0xff]
    %v362 = vld [vmem:[#allocation7 + $0x780] sm:$0xff]
    %v363 = vld [vmem:[#allocation7 + $0x788] sm:$0xff]
    %v364 = vld [vmem:[#allocation7 + $0x790] sm:$0xff]
    %v365 = vld [vmem:[#allocation7 + $0x798] sm:$0xff]
    %v366 = vld [vmem:[#allocation7 + $0x7a0] sm:$0xff]
    %v367 = vld [vmem:[#allocation7 + $0x7a8] sm:$0xff]
    %v368 = vld [vmem:[#allocation7 + $0x7b0] sm:$0xff]
    %v369 = vld [vmem:[#allocation7 + $0x7b8] sm:$0xff]
    %v370 = vld [vmem:[#allocation7 + $0x7c0] sm:$0xff]
    %v371 = vld [vmem:[#allocation7 + $0x7c8] sm:$0xff]
    %v372 = vld [vmem:[#allocation7 + $0x7d0] sm:$0xff]
    %v373 = vld [vmem:[#allocation7 + $0x7d8] sm:$0xff]
    %v374 = vld [vmem:[#allocation7 + $0x7e0] sm:$0xff]
    %v375 = vld [vmem:[#allocation7 + $0x7e8] sm:$0xff]
    %v376 = vld [vmem:[#allocation7 + $0x7f0] sm:$0xff]
    %v377 = vld [vmem:[#allocation7 + $0x7f8] sm:$0xff]
    %v634 = vunpack.c.l.b16 %v122
    %v635 = vunpack.c.h.b16 %v122
    %v636 = vunpack.c.l.b16 %v123
    %v637 = vunpack.c.h.b16 %v123
    %v638 = vunpack.c.l.b16 %v124
    %v639 = vunpack.c.h.b16 %v124
    %v640 = vunpack.c.l.b16 %v125
    %v641 = vunpack.c.h.b16 %v125
    %v642 = vunpack.c.l.b16 %v126
    %v643 = vunpack.c.h.b16 %v126
    %v644 = vunpack.c.l.b16 %v127
    %v645 = vunpack.c.h.b16 %v127
    %v646 = vunpack.c.l.b16 %v128
    %v647 = vunpack.c.h.b16 %v128
    %v648 = vunpack.c.l.b16 %v129
    %v649 = vunpack.c.h.b16 %v129
    %v650 = vunpack.c.l.b16 %v130
    %v651 = vunpack.c.h.b16 %v130
    %v652 = vunpack.c.l.b16 %v131
    %v653 = vunpack.c.h.b16 %v131
    %v654 = vunpack.c.l.b16 %v132
    %v655 = vunpack.c.h.b16 %v132
    %v656 = vunpack.c.l.b16 %v133
    %v657 = vunpack.c.h.b16 %v133
    %v658 = vunpack.c.l.b16 %v134
    %v659 = vunpack.c.h.b16 %v134
    %v660 = vunpack.c.l.b16 %v135
    %v661 = vunpack.c.h.b16 %v135
    %v662 = vunpack.c.l.b16 %v136
    %v663 = vunpack.c.h.b16 %v136
    %v664 = vunpack.c.l.b16 %v137
    %v665 = vunpack.c.h.b16 %v137
    %v666 = vunpack.c.l.b16 %v138
    %v667 = vunpack.c.h.b16 %v138
    %v668 = vunpack.c.l.b16 %v139
    %v669 = vunpack.c.h.b16 %v139
    %v670 = vunpack.c.l.b16 %v140
    %v671 = vunpack.c.h.b16 %v140
    %v672 = vunpack.c.l.b16 %v141
    %v673 = vunpack.c.h.b16 %v141
    %v674 = vunpack.c.l.b16 %v142
    %v675 = vunpack.c.h.b16 %v142
    %v676 = vunpack.c.l.b16 %v143
    %v677 = vunpack.c.h.b16 %v143
    %v678 = vunpack.c.l.b16 %v144
    %v679 = vunpack.c.h.b16 %v144
    %v680 = vunpack.c.l.b16 %v145
    %v681 = vunpack.c.h.b16 %v145
    %v682 = vunpack.c.l.b16 %v146
    %v683 = vunpack.c.h.b16 %v146
    %v684 = vunpack.c.l.b16 %v147
    %v685 = vunpack.c.h.b16 %v147
    %v686 = vunpack.c.l.b16 %v148
    %v687 = vunpack.c.h.b16 %v148
    %v688 = vunpack.c.l.b16 %v149
    %v689 = vunpack.c.h.b16 %v149
    %v690 = vunpack.c.l.b16 %v150
    %v691 = vunpack.c.h.b16 %v150
    %v692 = vunpack.c.l.b16 %v151
    %v693 = vunpack.c.h.b16 %v151
    %v694 = vunpack.c.l.b16 %v152
    %v695 = vunpack.c.h.b16 %v152
    %v696 = vunpack.c.l.b16 %v153
    %v697 = vunpack.c.h.b16 %v153
    %v698 = vunpack.c.l.b16 %v154
    %v699 = vunpack.c.h.b16 %v154
    %v700 = vunpack.c.l.b16 %v155
    %v701 = vunpack.c.h.b16 %v155
    %v702 = vunpack.c.l.b16 %v156
    %v703 = vunpack.c.h.b16 %v156
    %v704 = vunpack.c.l.b16 %v157
    %v705 = vunpack.c.h.b16 %v157
    %v706 = vunpack.c.l.b16 %v158
    %v707 = vunpack.c.h.b16 %v158
    %v708 = vunpack.c.l.b16 %v159
    %v709 = vunpack.c.h.b16 %v159
    %v710 = vunpack.c.l.b16 %v160
    %v711 = vunpack.c.h.b16 %v160
    %v712 = vunpack.c.l.b16 %v161
    %v713 = vunpack.c.h.b16 %v161
    %v714 = vunpack.c.l.b16 %v162
    %v715 = vunpack.c.h.b16 %v162
    %v716 = vunpack.c.l.b16 %v163
    %v717 = vunpack.c.h.b16 %v163
    %v718 = vunpack.c.l.b16 %v164
    %v719 = vunpack.c.h.b16 %v164
    %v720 = vunpack.c.l.b16 %v165
    %v721 = vunpack.c.h.b16 %v165
    %v722 = vunpack.c.l.b16 %v166
    %v723 = vunpack.c.h.b16 %v166
    %v724 = vunpack.c.l.b16 %v167
    %v725 = vunpack.c.h.b16 %v167
    %v726 = vunpack.c.l.b16 %v168
    %v727 = vunpack.c.h.b16 %v168
    %v728 = vunpack.c.l.b16 %v169
    %v729 = vunpack.c.h.b16 %v169
    %v730 = vunpack.c.l.b16 %v170
    %v731 = vunpack.c.h.b16 %v170
    %v732 = vunpack.c.l.b16 %v171
    %v733 = vunpack.c.h.b16 %v171
    %v734 = vunpack.c.l.b16 %v172
    %v735 = vunpack.c.h.b16 %v172
    %v736 = vunpack.c.l.b16 %v173
    %v737 = vunpack.c.h.b16 %v173
    %v738 = vunpack.c.l.b16 %v174
    %v739 = vunpack.c.h.b16 %v174
    %v740 = vunpack.c.l.b16 %v175
    %v741 = vunpack.c.h.b16 %v175
    %v742 = vunpack.c.l.b16 %v176
    %v743 = vunpack.c.h.b16 %v176
    %v744 = vunpack.c.l.b16 %v177
    %v745 = vunpack.c.h.b16 %v177
    %v746 = vunpack.c.l.b16 %v178
    %v747 = vunpack.c.h.b16 %v178
    %v748 = vunpack.c.l.b16 %v179
    %v749 = vunpack.c.h.b16 %v179
    %v750 = vunpack.c.l.b16 %v180
    %v751 = vunpack.c.h.b16 %v180
    %v752 = vunpack.c.l.b16 %v181
    %v753 = vunpack.c.h.b16 %v181
    %v754 = vunpack.c.l.b16 %v182
    %v755 = vunpack.c.h.b16 %v182
    %v756 = vunpack.c.l.b16 %v183
    %v757 = vunpack.c.h.b16 %v183
    %v758 = vunpack.c.l.b16 %v184
    %v759 = vunpack.c.h.b16 %v184
    %v760 = vunpack.c.l.b16 %v185
    %v761 = vunpack.c.h.b16 %v185
    %v762 = vunpack.c.l.b16 %v186
    %v763 = vunpack.c.h.b16 %v186
    %v764 = vunpack.c.l.b16 %v187
    %v765 = vunpack.c.h.b16 %v187
    %v766 = vunpack.c.l.b16 %v188
    %v767 = vunpack.c.h.b16 %v188
    %v768 = vunpack.c.l.b16 %v189
    %v769 = vunpack.c.h.b16 %v189
    %v770 = vunpack.c.l.b16 %v190
    %v771 = vunpack.c.h.b16 %v190
    %v772 = vunpack.c.l.b16 %v191
    %v773 = vunpack.c.h.b16 %v191
    %v774 = vunpack.c.l.b16 %v192
    %v775 = vunpack.c.h.b16 %v192
    %v776 = vunpack.c.l.b16 %v193
    %v777 = vunpack.c.h.b16 %v193
    %v778 = vunpack.c.l.b16 %v194
    %v779 = vunpack.c.h.b16 %v194
    %v780 = vunpack.c.l.b16 %v195
    %v781 = vunpack.c.h.b16 %v195
    %v782 = vunpack.c.l.b16 %v196
    %v783 = vunpack.c.h.b16 %v196
    %v784 = vunpack.c.l.b16 %v197
    %v785 = vunpack.c.h.b16 %v197
    %v786 = vunpack.c.l.b16 %v198
    %v787 = vunpack.c.h.b16 %v198
    %v788 = vunpack.c.l.b16 %v199
    %v789 = vunpack.c.h.b16 %v199
    %v790 = vunpack.c.l.b16 %v200
    %v791 = vunpack.c.h.b16 %v200
    %v792 = vunpack.c.l.b16 %v201
    %v793 = vunpack.c.h.b16 %v201
    %v794 = vunpack.c.l.b16 %v202
    %v795 = vunpack.c.h.b16 %v202
    %v796 = vunpack.c.l.b16 %v203
    %v797 = vunpack.c.h.b16 %v203
    %v798 = vunpack.c.l.b16 %v204
    %v799 = vunpack.c.h.b16 %v204
    %v800 = vunpack.c.l.b16 %v205
    %v801 = vunpack.c.h.b16 %v205
    %v802 = vunpack.c.l.b16 %v206
    %v803 = vunpack.c.h.b16 %v206
    %v804 = vunpack.c.l.b16 %v207
    %v805 = vunpack.c.h.b16 %v207
    %v806 = vunpack.c.l.b16 %v208
    %v807 = vunpack.c.h.b16 %v208
    %v808 = vunpack.c.l.b16 %v209
    %v809 = vunpack.c.h.b16 %v209
    %v810 = vunpack.c.l.b16 %v210
    %v811 = vunpack.c.h.b16 %v210
    %v812 = vunpack.c.l.b16 %v211
    %v813 = vunpack.c.h.b16 %v211
    %v814 = vunpack.c.l.b16 %v212
    %v815 = vunpack.c.h.b16 %v212
    %v816 = vunpack.c.l.b16 %v213
    %v817 = vunpack.c.h.b16 %v213
    %v818 = vunpack.c.l.b16 %v214
    %v819 = vunpack.c.h.b16 %v214
    %v820 = vunpack.c.l.b16 %v215
    %v821 = vunpack.c.h.b16 %v215
    %v822 = vunpack.c.l.b16 %v216
    %v823 = vunpack.c.h.b16 %v216
    %v824 = vunpack.c.l.b16 %v217
    %v825 = vunpack.c.h.b16 %v217
    %v826 = vunpack.c.l.b16 %v218
    %v827 = vunpack.c.h.b16 %v218
    %v828 = vunpack.c.l.b16 %v219
    %v829 = vunpack.c.h.b16 %v219
    %v830 = vunpack.c.l.b16 %v220
    %v831 = vunpack.c.h.b16 %v220
    %v832 = vunpack.c.l.b16 %v221
    %v833 = vunpack.c.h.b16 %v221
    %v834 = vunpack.c.l.b16 %v222
    %v835 = vunpack.c.h.b16 %v222
    %v836 = vunpack.c.l.b16 %v223
    %v837 = vunpack.c.h.b16 %v223
    %v838 = vunpack.c.l.b16 %v224
    %v839 = vunpack.c.h.b16 %v224
    %v840 = vunpack.c.l.b16 %v225
    %v841 = vunpack.c.h.b16 %v225
    %v842 = vunpack.c.l.b16 %v226
    %v843 = vunpack.c.h.b16 %v226
    %v844 = vunpack.c.l.b16 %v227
    %v845 = vunpack.c.h.b16 %v227
    %v846 = vunpack.c.l.b16 %v228
    %v847 = vunpack.c.h.b16 %v228
    %v848 = vunpack.c.l.b16 %v229
    %v849 = vunpack.c.h.b16 %v229
    %v850 = vunpack.c.l.b16 %v230
    %v851 = vunpack.c.h.b16 %v230
    %v852 = vunpack.c.l.b16 %v231
    %v853 = vunpack.c.h.b16 %v231
    %v854 = vunpack.c.l.b16 %v232
    %v855 = vunpack.c.h.b16 %v232
    %v856 = vunpack.c.l.b16 %v233
    %v857 = vunpack.c.h.b16 %v233
    %v858 = vunpack.c.l.b16 %v234
    %v859 = vunpack.c.h.b16 %v234
    %v860 = vunpack.c.l.b16 %v235
    %v861 = vunpack.c.h.b16 %v235
    %v862 = vunpack.c.l.b16 %v236
    %v863 = vunpack.c.h.b16 %v236
    %v864 = vunpack.c.l.b16 %v237
    %v865 = vunpack.c.h.b16 %v237
    %v866 = vunpack.c.l.b16 %v238
    %v867 = vunpack.c.h.b16 %v238
    %v868 = vunpack.c.l.b16 %v239
    %v869 = vunpack.c.h.b16 %v239
    %v870 = vunpack.c.l.b16 %v240
    %v871 = vunpack.c.h.b16 %v240
    %v872 = vunpack.c.l.b16 %v241
    %v873 = vunpack.c.h.b16 %v241
    %v874 = vunpack.c.l.b16 %v242
    %v875 = vunpack.c.h.b16 %v242
    %v876 = vunpack.c.l.b16 %v243
    %v877 = vunpack.c.h.b16 %v243
    %v878 = vunpack.c.l.b16 %v244
    %v879 = vunpack.c.h.b16 %v244
    %v880 = vunpack.c.l.b16 %v245
    %v881 = vunpack.c.h.b16 %v245
    %v882 = vunpack.c.l.b16 %v246
    %v883 = vunpack.c.h.b16 %v246
    %v884 = vunpack.c.l.b16 %v247
    %v885 = vunpack.c.h.b16 %v247
    %v886 = vunpack.c.l.b16 %v248
    %v887 = vunpack.c.h.b16 %v248
    %v888 = vunpack.c.l.b16 %v249
    %v889 = vunpack.c.h.b16 %v249
    %v890 = vunpack.c.l.b16 %v250
    %v891 = vunpack.c.h.b16 %v250
    %v892 = vunpack.c.l.b16 %v251
    %v893 = vunpack.c.h.b16 %v251
    %v894 = vunpack.c.l.b16 %v252
    %v895 = vunpack.c.h.b16 %v252
    %v896 = vunpack.c.l.b16 %v253
    %v897 = vunpack.c.h.b16 %v253
    %v898 = vunpack.c.l.b16 %v254
    %v899 = vunpack.c.h.b16 %v254
    %v900 = vunpack.c.l.b16 %v255
    %v901 = vunpack.c.h.b16 %v255
    %v902 = vunpack.c.l.b16 %v256
    %v903 = vunpack.c.h.b16 %v256
    %v904 = vunpack.c.l.b16 %v257
    %v905 = vunpack.c.h.b16 %v257
    %v906 = vunpack.c.l.b16 %v258
    %v907 = vunpack.c.h.b16 %v258
    %v908 = vunpack.c.l.b16 %v259
    %v909 = vunpack.c.h.b16 %v259
    %v910 = vunpack.c.l.b16 %v260
    %v911 = vunpack.c.h.b16 %v260
    %v912 = vunpack.c.l.b16 %v261
    %v913 = vunpack.c.h.b16 %v261
    %v914 = vunpack.c.l.b16 %v262
    %v915 = vunpack.c.h.b16 %v262
    %v916 = vunpack.c.l.b16 %v263
    %v917 = vunpack.c.h.b16 %v263
    %v918 = vunpack.c.l.b16 %v264
    %v919 = vunpack.c.h.b16 %v264
    %v920 = vunpack.c.l.b16 %v265
    %v921 = vunpack.c.h.b16 %v265
    %v922 = vunpack.c.l.b16 %v266
    %v923 = vunpack.c.h.b16 %v266
    %v924 = vunpack.c.l.b16 %v267
    %v925 = vunpack.c.h.b16 %v267
    %v926 = vunpack.c.l.b16 %v268
    %v927 = vunpack.c.h.b16 %v268
    %v928 = vunpack.c.l.b16 %v269
    %v929 = vunpack.c.h.b16 %v269
    %v930 = vunpack.c.l.b16 %v270
    %v931 = vunpack.c.h.b16 %v270
    %v932 = vunpack.c.l.b16 %v271
    %v933 = vunpack.c.h.b16 %v271
    %v934 = vunpack.c.l.b16 %v272
    %v935 = vunpack.c.h.b16 %v272
    %v936 = vunpack.c.l.b16 %v273
    %v937 = vunpack.c.h.b16 %v273
    %v938 = vunpack.c.l.b16 %v274
    %v939 = vunpack.c.h.b16 %v274
    %v940 = vunpack.c.l.b16 %v275
    %v941 = vunpack.c.h.b16 %v275
    %v942 = vunpack.c.l.b16 %v276
    %v943 = vunpack.c.h.b16 %v276
    %v944 = vunpack.c.l.b16 %v277
    %v945 = vunpack.c.h.b16 %v277
    %v946 = vunpack.c.l.b16 %v278
    %v947 = vunpack.c.h.b16 %v278
    %v948 = vunpack.c.l.b16 %v279
    %v949 = vunpack.c.h.b16 %v279
    %v950 = vunpack.c.l.b16 %v280
    %v951 = vunpack.c.h.b16 %v280
    %v952 = vunpack.c.l.b16 %v281
    %v953 = vunpack.c.h.b16 %v281
    %v954 = vunpack.c.l.b16 %v282
    %v955 = vunpack.c.h.b16 %v282
    %v956 = vunpack.c.l.b16 %v283
    %v957 = vunpack.c.h.b16 %v283
    %v958 = vunpack.c.l.b16 %v284
    %v959 = vunpack.c.h.b16 %v284
    %v960 = vunpack.c.l.b16 %v285
    %v961 = vunpack.c.h.b16 %v285
    %v962 = vunpack.c.l.b16 %v286
    %v963 = vunpack.c.h.b16 %v286
    %v964 = vunpack.c.l.b16 %v287
    %v965 = vunpack.c.h.b16 %v287
    %v966 = vunpack.c.l.b16 %v288
    %v967 = vunpack.c.h.b16 %v288
    %v968 = vunpack.c.l.b16 %v289
    %v969 = vunpack.c.h.b16 %v289
    %v970 = vunpack.c.l.b16 %v290
    %v971 = vunpack.c.h.b16 %v290
    %v972 = vunpack.c.l.b16 %v291
    %v973 = vunpack.c.h.b16 %v291
    %v974 = vunpack.c.l.b16 %v292
    %v975 = vunpack.c.h.b16 %v292
    %v976 = vunpack.c.l.b16 %v293
    %v977 = vunpack.c.h.b16 %v293
    %v978 = vunpack.c.l.b16 %v294
    %v979 = vunpack.c.h.b16 %v294
    %v980 = vunpack.c.l.b16 %v295
    %v981 = vunpack.c.h.b16 %v295
    %v982 = vunpack.c.l.b16 %v296
    %v983 = vunpack.c.h.b16 %v296
    %v984 = vunpack.c.l.b16 %v297
    %v985 = vunpack.c.h.b16 %v297
    %v986 = vunpack.c.l.b16 %v298
    %v987 = vunpack.c.h.b16 %v298
    %v988 = vunpack.c.l.b16 %v299
    %v989 = vunpack.c.h.b16 %v299
    %v990 = vunpack.c.l.b16 %v300
    %v991 = vunpack.c.h.b16 %v300
    %v992 = vunpack.c.l.b16 %v301
    %v993 = vunpack.c.h.b16 %v301
    %v994 = vunpack.c.l.b16 %v302
    %v995 = vunpack.c.h.b16 %v302
    %v996 = vunpack.c.l.b16 %v303
    %v997 = vunpack.c.h.b16 %v303
    %v998 = vunpack.c.l.b16 %v304
    %v999 = vunpack.c.h.b16 %v304
    %v1000 = vunpack.c.l.b16 %v305
    %v1001 = vunpack.c.h.b16 %v305
    %v1002 = vunpack.c.l.b16 %v306
    %v1003 = vunpack.c.h.b16 %v306
    %v1004 = vunpack.c.l.b16 %v307
    %v1005 = vunpack.c.h.b16 %v307
    %v1006 = vunpack.c.l.b16 %v308
    %v1007 = vunpack.c.h.b16 %v308
    %v1008 = vunpack.c.l.b16 %v309
    %v1009 = vunpack.c.h.b16 %v309
    %v1010 = vunpack.c.l.b16 %v310
    %v1011 = vunpack.c.h.b16 %v310
    %v1012 = vunpack.c.l.b16 %v311
    %v1013 = vunpack.c.h.b16 %v311
    %v1014 = vunpack.c.l.b16 %v312
    %v1015 = vunpack.c.h.b16 %v312
    %v1016 = vunpack.c.l.b16 %v313
    %v1017 = vunpack.c.h.b16 %v313
    %v1018 = vunpack.c.l.b16 %v314
    %v1019 = vunpack.c.h.b16 %v314
    %v1020 = vunpack.c.l.b16 %v315
    %v1021 = vunpack.c.h.b16 %v315
    %v1022 = vunpack.c.l.b16 %v316
    %v1023 = vunpack.c.h.b16 %v316
    %v1024 = vunpack.c.l.b16 %v317
    %v1025 = vunpack.c.h.b16 %v317
    %v1026 = vunpack.c.l.b16 %v318
    %v1027 = vunpack.c.h.b16 %v318
    %v1028 = vunpack.c.l.b16 %v319
    %v1029 = vunpack.c.h.b16 %v319
    %v1030 = vunpack.c.l.b16 %v320
    %v1031 = vunpack.c.h.b16 %v320
    %v1032 = vunpack.c.l.b16 %v321
    %v1033 = vunpack.c.h.b16 %v321
    %v1034 = vunpack.c.l.b16 %v322
    %v1035 = vunpack.c.h.b16 %v322
    %v1036 = vunpack.c.l.b16 %v323
    %v1037 = vunpack.c.h.b16 %v323
    %v1038 = vunpack.c.l.b16 %v324
    %v1039 = vunpack.c.h.b16 %v324
    %v1040 = vunpack.c.l.b16 %v325
    %v1041 = vunpack.c.h.b16 %v325
    %v1042 = vunpack.c.l.b16 %v326
    %v1043 = vunpack.c.h.b16 %v326
    %v1044 = vunpack.c.l.b16 %v327
    %v1045 = vunpack.c.h.b16 %v327
    %v1046 = vunpack.c.l.b16 %v328
    %v1047 = vunpack.c.h.b16 %v328
    %v1048 = vunpack.c.l.b16 %v329
    %v1049 = vunpack.c.h.b16 %v329
    %v1050 = vunpack.c.l.b16 %v330
    %v1051 = vunpack.c.h.b16 %v330
    %v1052 = vunpack.c.l.b16 %v331
    %v1053 = vunpack.c.h.b16 %v331
    %v1054 = vunpack.c.l.b16 %v332
    %v1055 = vunpack.c.h.b16 %v332
    %v1056 = vunpack.c.l.b16 %v333
    %v1057 = vunpack.c.h.b16 %v333
    %v1058 = vunpack.c.l.b16 %v334
    %v1059 = vunpack.c.h.b16 %v334
    %v1060 = vunpack.c.l.b16 %v335
    %v1061 = vunpack.c.h.b16 %v335
    %v1062 = vunpack.c.l.b16 %v336
    %v1063 = vunpack.c.h.b16 %v336
    %v1064 = vunpack.c.l.b16 %v337
    %v1065 = vunpack.c.h.b16 %v337
    %v1066 = vunpack.c.l.b16 %v338
    %v1067 = vunpack.c.h.b16 %v338
    %v1068 = vunpack.c.l.b16 %v339
    %v1069 = vunpack.c.h.b16 %v339
    %v1070 = vunpack.c.l.b16 %v340
    %v1071 = vunpack.c.h.b16 %v340
    %v1072 = vunpack.c.l.b16 %v341
    %v1073 = vunpack.c.h.b16 %v341
    %v1074 = vunpack.c.l.b16 %v342
    %v1075 = vunpack.c.h.b16 %v342
    %v1076 = vunpack.c.l.b16 %v343
    %v1077 = vunpack.c.h.b16 %v343
    %v1078 = vunpack.c.l.b16 %v344
    %v1079 = vunpack.c.h.b16 %v344
    %v1080 = vunpack.c.l.b16 %v345
    %v1081 = vunpack.c.h.b16 %v345
    %v1082 = vunpack.c.l.b16 %v346
    %v1083 = vunpack.c.h.b16 %v346
    %v1084 = vunpack.c.l.b16 %v347
    %v1085 = vunpack.c.h.b16 %v347
    %v1086 = vunpack.c.l.b16 %v348
    %v1087 = vunpack.c.h.b16 %v348
    %v1088 = vunpack.c.l.b16 %v349
    %v1089 = vunpack.c.h.b16 %v349
    %v1090 = vunpack.c.l.b16 %v350
    %v1091 = vunpack.c.h.b16 %v350
    %v1092 = vunpack.c.l.b16 %v351
    %v1093 = vunpack.c.h.b16 %v351
    %v1094 = vunpack.c.l.b16 %v352
    %v1095 = vunpack.c.h.b16 %v352
    %v1096 = vunpack.c.l.b16 %v353
    %v1097 = vunpack.c.h.b16 %v353
    %v1098 = vunpack.c.l.b16 %v354
    %v1099 = vunpack.c.h.b16 %v354
    %v1100 = vunpack.c.l.b16 %v355
    %v1101 = vunpack.c.h.b16 %v355
    %v1102 = vunpack.c.l.b16 %v356
    %v1103 = vunpack.c.h.b16 %v356
    %v1104 = vunpack.c.l.b16 %v357
    %v1105 = vunpack.c.h.b16 %v357
    %v1106 = vunpack.c.l.b16 %v358
    %v1107 = vunpack.c.h.b16 %v358
    %v1108 = vunpack.c.l.b16 %v359
    %v1109 = vunpack.c.h.b16 %v359
    %v1110 = vunpack.c.l.b16 %v360
    %v1111 = vunpack.c.h.b16 %v360
    %v1112 = vunpack.c.l.b16 %v361
    %v1113 = vunpack.c.h.b16 %v361
    %v1114 = vunpack.c.l.b16 %v362
    %v1115 = vunpack.c.h.b16 %v362
    %v1116 = vunpack.c.l.b16 %v363
    %v1117 = vunpack.c.h.b16 %v363
    %v1118 = vunpack.c.l.b16 %v364
    %v1119 = vunpack.c.h.b16 %v364
    %v1120 = vunpack.c.l.b16 %v365
    %v1121 = vunpack.c.h.b16 %v365
    %v1122 = vunpack.c.l.b16 %v366
    %v1123 = vunpack.c.h.b16 %v366
    %v1124 = vunpack.c.l.b16 %v367
    %v1125 = vunpack.c.h.b16 %v367
    %v1126 = vunpack.c.l.b16 %v368
    %v1127 = vunpack.c.h.b16 %v368
    %v1128 = vunpack.c.l.b16 %v369
    %v1129 = vunpack.c.h.b16 %v369
    %v1130 = vunpack.c.l.b16 %v370
    %v1131 = vunpack.c.h.b16 %v370
    %v1132 = vunpack.c.l.b16 %v371
    %v1133 = vunpack.c.h.b16 %v371
    %v1134 = vunpack.c.l.b16 %v372
    %v1135 = vunpack.c.h.b16 %v372
    %v1136 = vunpack.c.l.b16 %v373
    %v1137 = vunpack.c.h.b16 %v373
    %v1138 = vunpack.c.l.b16 %v374
    %v1139 = vunpack.c.h.b16 %v374
    %v1140 = vunpack.c.l.b16 %v375
    %v1141 = vunpack.c.h.b16 %v375
    %v1142 = vunpack.c.l.b16 %v376
    %v1143 = vunpack.c.h.b16 %v376
    %v1144 = vunpack.c.l.b16 %v377
    %v1145 = vunpack.c.h.b16 %v377
    %v1146 = vpack.c.b16 %v638, %v634
    %v1147 = vpack.c.b16 %v639, %v635
    %v1148 = vpack.c.b16 %v640, %v636
    %v1149 = vpack.c.b16 %v641, %v637
    %v1150 = vpack.c.b16 %v646, %v642
    %v1151 = vpack.c.b16 %v647, %v643
    %v1152 = vpack.c.b16 %v648, %v644
    %v1153 = vpack.c.b16 %v649, %v645
    %v1154 = vpack.c.b16 %v654, %v650
    %v1155 = vpack.c.b16 %v655, %v651
    %v1156 = vpack.c.b16 %v656, %v652
    %v1157 = vpack.c.b16 %v657, %v653
    %v1158 = vpack.c.b16 %v662, %v658
    %v1159 = vpack.c.b16 %v663, %v659
    %v1160 = vpack.c.b16 %v664, %v660
    %v1161 = vpack.c.b16 %v665, %v661
    %v1162 = vpack.c.b16 %v670, %v666
    %v1163 = vpack.c.b16 %v671, %v667
    %v1164 = vpack.c.b16 %v672, %v668
    %v1165 = vpack.c.b16 %v673, %v669
    %v1166 = vpack.c.b16 %v678, %v674
    %v1167 = vpack.c.b16 %v679, %v675
    %v1168 = vpack.c.b16 %v680, %v676
    %v1169 = vpack.c.b16 %v681, %v677
    %v1170 = vpack.c.b16 %v686, %v682
    %v1171 = vpack.c.b16 %v687, %v683
    %v1172 = vpack.c.b16 %v688, %v684
    %v1173 = vpack.c.b16 %v689, %v685
    %v1174 = vpack.c.b16 %v694, %v690
    %v1175 = vpack.c.b16 %v695, %v691
    %v1176 = vpack.c.b16 %v696, %v692
    %v1177 = vpack.c.b16 %v697, %v693
    %v1178 = vpack.c.b16 %v702, %v698
    %v1179 = vpack.c.b16 %v703, %v699
    %v1180 = vpack.c.b16 %v704, %v700
    %v1181 = vpack.c.b16 %v705, %v701
    %v1182 = vpack.c.b16 %v710, %v706
    %v1183 = vpack.c.b16 %v711, %v707
    %v1184 = vpack.c.b16 %v712, %v708
    %v1185 = vpack.c.b16 %v713, %v709
    %v1186 = vpack.c.b16 %v718, %v714
    %v1187 = vpack.c.b16 %v719, %v715
    %v1188 = vpack.c.b16 %v720, %v716
    %v1189 = vpack.c.b16 %v721, %v717
    %v1190 = vpack.c.b16 %v726, %v722
    %v1191 = vpack.c.b16 %v727, %v723
    %v1192 = vpack.c.b16 %v728, %v724
    %v1193 = vpack.c.b16 %v729, %v725
    %v1194 = vpack.c.b16 %v734, %v730
    %v1195 = vpack.c.b16 %v735, %v731
    %v1196 = vpack.c.b16 %v736, %v732
    %v1197 = vpack.c.b16 %v737, %v733
    %v1198 = vpack.c.b16 %v742, %v738
    %v1199 = vpack.c.b16 %v743, %v739
    %v1200 = vpack.c.b16 %v744, %v740
    %v1201 = vpack.c.b16 %v745, %v741
    %v1202 = vpack.c.b16 %v750, %v746
    %v1203 = vpack.c.b16 %v751, %v747
    %v1204 = vpack.c.b16 %v752, %v748
    %v1205 = vpack.c.b16 %v753, %v749
    %v1206 = vpack.c.b16 %v758, %v754
    %v1207 = vpack.c.b16 %v759, %v755
    %v1208 = vpack.c.b16 %v760, %v756
    %v1209 = vpack.c.b16 %v761, %v757
    %v1210 = vpack.c.b16 %v766, %v762
    %v1211 = vpack.c.b16 %v767, %v763
    %v1212 = vpack.c.b16 %v768, %v764
    %v1213 = vpack.c.b16 %v769, %v765
    %v1214 = vpack.c.b16 %v774, %v770
    %v1215 = vpack.c.b16 %v775, %v771
    %v1216 = vpack.c.b16 %v776, %v772
    %v1217 = vpack.c.b16 %v777, %v773
    %v1218 = vpack.c.b16 %v782, %v778
    %v1219 = vpack.c.b16 %v783, %v779
    %v1220 = vpack.c.b16 %v784, %v780
    %v1221 = vpack.c.b16 %v785, %v781
    %v1222 = vpack.c.b16 %v790, %v786
    %v1223 = vpack.c.b16 %v791, %v787
    %v1224 = vpack.c.b16 %v792, %v788
    %v1225 = vpack.c.b16 %v793, %v789
    %v1226 = vpack.c.b16 %v798, %v794
    %v1227 = vpack.c.b16 %v799, %v795
    %v1228 = vpack.c.b16 %v800, %v796
    %v1229 = vpack.c.b16 %v801, %v797
    %v1230 = vpack.c.b16 %v806, %v802
    %v1231 = vpack.c.b16 %v807, %v803
    %v1232 = vpack.c.b16 %v808, %v804
    %v1233 = vpack.c.b16 %v809, %v805
    %v1234 = vpack.c.b16 %v814, %v810
    %v1235 = vpack.c.b16 %v815, %v811
    %v1236 = vpack.c.b16 %v816, %v812
    %v1237 = vpack.c.b16 %v817, %v813
    %v1238 = vpack.c.b16 %v822, %v818
    %v1239 = vpack.c.b16 %v823, %v819
    %v1240 = vpack.c.b16 %v824, %v820
    %v1241 = vpack.c.b16 %v825, %v821
    %v1242 = vpack.c.b16 %v830, %v826
    %v1243 = vpack.c.b16 %v831, %v827
    %v1244 = vpack.c.b16 %v832, %v828
    %v1245 = vpack.c.b16 %v833, %v829
    %v1246 = vpack.c.b16 %v838, %v834
    %v1247 = vpack.c.b16 %v839, %v835
    %v1248 = vpack.c.b16 %v840, %v836
    %v1249 = vpack.c.b16 %v841, %v837
    %v1250 = vpack.c.b16 %v846, %v842
    %v1251 = vpack.c.b16 %v847, %v843
    %v1252 = vpack.c.b16 %v848, %v844
    %v1253 = vpack.c.b16 %v849, %v845
    %v1254 = vpack.c.b16 %v854, %v850
    %v1255 = vpack.c.b16 %v855, %v851
    %v1256 = vpack.c.b16 %v856, %v852
    %v1257 = vpack.c.b16 %v857, %v853
    %v1258 = vpack.c.b16 %v862, %v858
    %v1259 = vpack.c.b16 %v863, %v859
    %v1260 = vpack.c.b16 %v864, %v860
    %v1261 = vpack.c.b16 %v865, %v861
    %v1262 = vpack.c.b16 %v870, %v866
    %v1263 = vpack.c.b16 %v871, %v867
    %v1264 = vpack.c.b16 %v872, %v868
    %v1265 = vpack.c.b16 %v873, %v869
    %v1266 = vpack.c.b16 %v878, %v874
    %v1267 = vpack.c.b16 %v879, %v875
    %v1268 = vpack.c.b16 %v880, %v876
    %v1269 = vpack.c.b16 %v881, %v877
    %v1270 = vpack.c.b16 %v886, %v882
    %v1271 = vpack.c.b16 %v887, %v883
    %v1272 = vpack.c.b16 %v888, %v884
    %v1273 = vpack.c.b16 %v889, %v885
    %v1274 = vpack.c.b16 %v894, %v890
    %v1275 = vpack.c.b16 %v895, %v891
    %v1276 = vpack.c.b16 %v896, %v892
    %v1277 = vpack.c.b16 %v897, %v893
    %v1278 = vpack.c.b16 %v902, %v898
    %v1279 = vpack.c.b16 %v903, %v899
    %v1280 = vpack.c.b16 %v904, %v900
    %v1281 = vpack.c.b16 %v905, %v901
    %v1282 = vpack.c.b16 %v910, %v906
    %v1283 = vpack.c.b16 %v911, %v907
    %v1284 = vpack.c.b16 %v912, %v908
    %v1285 = vpack.c.b16 %v913, %v909
    %v1286 = vpack.c.b16 %v918, %v914
    %v1287 = vpack.c.b16 %v919, %v915
    %v1288 = vpack.c.b16 %v920, %v916
    %v1289 = vpack.c.b16 %v921, %v917
    %v1290 = vpack.c.b16 %v926, %v922
    %v1291 = vpack.c.b16 %v927, %v923
    %v1292 = vpack.c.b16 %v928, %v924
    %v1293 = vpack.c.b16 %v929, %v925
    %v1294 = vpack.c.b16 %v934, %v930
    %v1295 = vpack.c.b16 %v935, %v931
    %v1296 = vpack.c.b16 %v936, %v932
    %v1297 = vpack.c.b16 %v937, %v933
    %v1298 = vpack.c.b16 %v942, %v938
    %v1299 = vpack.c.b16 %v943, %v939
    %v1300 = vpack.c.b16 %v944, %v940
    %v1301 = vpack.c.b16 %v945, %v941
    %v1302 = vpack.c.b16 %v950, %v946
    %v1303 = vpack.c.b16 %v951, %v947
    %v1304 = vpack.c.b16 %v952, %v948
    %v1305 = vpack.c.b16 %v953, %v949
    %v1306 = vpack.c.b16 %v958, %v954
    %v1307 = vpack.c.b16 %v959, %v955
    %v1308 = vpack.c.b16 %v960, %v956
    %v1309 = vpack.c.b16 %v961, %v957
    %v1310 = vpack.c.b16 %v966, %v962
    %v1311 = vpack.c.b16 %v967, %v963
    %v1312 = vpack.c.b16 %v968, %v964
    %v1313 = vpack.c.b16 %v969, %v965
    %v1314 = vpack.c.b16 %v974, %v970
    %v1315 = vpack.c.b16 %v975, %v971
    %v1316 = vpack.c.b16 %v976, %v972
    %v1317 = vpack.c.b16 %v977, %v973
    %v1318 = vpack.c.b16 %v982, %v978
    %v1319 = vpack.c.b16 %v983, %v979
    %v1320 = vpack.c.b16 %v984, %v980
    %v1321 = vpack.c.b16 %v985, %v981
    %v1322 = vpack.c.b16 %v990, %v986
    %v1323 = vpack.c.b16 %v991, %v987
    %v1324 = vpack.c.b16 %v992, %v988
    %v1325 = vpack.c.b16 %v993, %v989
    %v1326 = vpack.c.b16 %v998, %v994
    %v1327 = vpack.c.b16 %v999, %v995
    %v1328 = vpack.c.b16 %v1000, %v996
    %v1329 = vpack.c.b16 %v1001, %v997
    %v1330 = vpack.c.b16 %v1006, %v1002
    %v1331 = vpack.c.b16 %v1007, %v1003
    %v1332 = vpack.c.b16 %v1008, %v1004
    %v1333 = vpack.c.b16 %v1009, %v1005
    %v1334 = vpack.c.b16 %v1014, %v1010
    %v1335 = vpack.c.b16 %v1015, %v1011
    %v1336 = vpack.c.b16 %v1016, %v1012
    %v1337 = vpack.c.b16 %v1017, %v1013
    %v1338 = vpack.c.b16 %v1022, %v1018
    %v1339 = vpack.c.b16 %v1023, %v1019
    %v1340 = vpack.c.b16 %v1024, %v1020
    %v1341 = vpack.c.b16 %v1025, %v1021
    %v1342 = vpack.c.b16 %v1030, %v1026
    %v1343 = vpack.c.b16 %v1031, %v1027
    %v1344 = vpack.c.b16 %v1032, %v1028
    %v1345 = vpack.c.b16 %v1033, %v1029
    %v1346 = vpack.c.b16 %v1038, %v1034
    %v1347 = vpack.c.b16 %v1039, %v1035
    %v1348 = vpack.c.b16 %v1040, %v1036
    %v1349 = vpack.c.b16 %v1041, %v1037
    %v1350 = vpack.c.b16 %v1046, %v1042
    %v1351 = vpack.c.b16 %v1047, %v1043
    %v1352 = vpack.c.b16 %v1048, %v1044
    %v1353 = vpack.c.b16 %v1049, %v1045
    %v1354 = vpack.c.b16 %v1054, %v1050
    %v1355 = vpack.c.b16 %v1055, %v1051
    %v1356 = vpack.c.b16 %v1056, %v1052
    %v1357 = vpack.c.b16 %v1057, %v1053
    %v1358 = vpack.c.b16 %v1062, %v1058
    %v1359 = vpack.c.b16 %v1063, %v1059
    %v1360 = vpack.c.b16 %v1064, %v1060
    %v1361 = vpack.c.b16 %v1065, %v1061
    %v1362 = vpack.c.b16 %v1070, %v1066
    %v1363 = vpack.c.b16 %v1071, %v1067
    %v1364 = vpack.c.b16 %v1072, %v1068
    %v1365 = vpack.c.b16 %v1073, %v1069
    %v1366 = vpack.c.b16 %v1078, %v1074
    %v1367 = vpack.c.b16 %v1079, %v1075
    %v1368 = vpack.c.b16 %v1080, %v1076
    %v1369 = vpack.c.b16 %v1081, %v1077
    %v1370 = vpack.c.b16 %v1086, %v1082
    %v1371 = vpack.c.b16 %v1087, %v1083
    %v1372 = vpack.c.b16 %v1088, %v1084
    %v1373 = vpack.c.b16 %v1089, %v1085
    %v1374 = vpack.c.b16 %v1094, %v1090
    %v1375 = vpack.c.b16 %v1095, %v1091
    %v1376 = vpack.c.b16 %v1096, %v1092
    %v1377 = vpack.c.b16 %v1097, %v1093
    %v1378 = vpack.c.b16 %v1102, %v1098
    %v1379 = vpack.c.b16 %v1103, %v1099
    %v1380 = vpack.c.b16 %v1104, %v1100
    %v1381 = vpack.c.b16 %v1105, %v1101
    %v1382 = vpack.c.b16 %v1110, %v1106
    %v1383 = vpack.c.b16 %v1111, %v1107
    %v1384 = vpack.c.b16 %v1112, %v1108
    %v1385 = vpack.c.b16 %v1113, %v1109
    %v1386 = vpack.c.b16 %v1118, %v1114
    %v1387 = vpack.c.b16 %v1119, %v1115
    %v1388 = vpack.c.b16 %v1120, %v1116
    %v1389 = vpack.c.b16 %v1121, %v1117
    %v1390 = vpack.c.b16 %v1126, %v1122
    %v1391 = vpack.c.b16 %v1127, %v1123
    %v1392 = vpack.c.b16 %v1128, %v1124
    %v1393 = vpack.c.b16 %v1129, %v1125
    %v1394 = vpack.c.b16 %v1134, %v1130
    %v1395 = vpack.c.b16 %v1135, %v1131
    %v1396 = vpack.c.b16 %v1136, %v1132
    %v1397 = vpack.c.b16 %v1137, %v1133
    %v1398 = vpack.c.b16 %v1142, %v1138
    %v1399 = vpack.c.b16 %v1143, %v1139
    %v1400 = vpack.c.b16 %v1144, %v1140
    %v1401 = vpack.c.b16 %v1145, %v1141
    %1658 = vmatprep.subr.bf16.mxu0 %v1175
    %1659 = vmatpush1.bf16.msra.mxu0 %v1174
    %1660 = vmatprep.subr.bf16.mxu0 %v1171
    %1661 = vmatpush1.bf16.msra.mxu0 %v1170
    %1662 = vmatprep.subr.bf16.mxu0 %v1167
    %1663 = vmatpush1.bf16.msra.mxu0 %v1166
    %1664 = vmatprep.subr.bf16.mxu0 %v1163
    %1665 = vmatpush1.bf16.msra.mxu0 %v1162
    %1666 = vmatprep.subr.bf16.mxu0 %v1159
    %1667 = vmatpush1.bf16.msra.mxu0 %v1158
    %1668 = vmatprep.subr.bf16.mxu0 %v1155
    %1669 = vmatpush1.bf16.msra.mxu0 %v1154
    %1670 = vmatprep.subr.bf16.mxu0 %v1151
    %1671 = vmatpush1.bf16.msra.mxu0 %v1150
    %1672 = vmatprep.subr.bf16.mxu0 %v1147
    %1673 = vmatpush1.bf16.msra.mxu0 %v1146
    %1674 = vmatprep.subr.bf16.mxu0 %v1207
    %1675 = vmatpush2.bf16.msra.mxu0 %v1206
    %1676 = vmatprep.subr.bf16.mxu0 %v1203
    %1677 = vmatpush2.bf16.msra.mxu0 %v1202
    %1678 = vmatprep.subr.bf16.mxu0 %v1199
    %1679 = vmatpush2.bf16.msra.mxu0 %v1198
    %1680 = vmatprep.subr.bf16.mxu0 %v1195
    %1681 = vmatpush2.bf16.msra.mxu0 %v1194
    %1682 = vmatprep.subr.bf16.mxu0 %v1191
    %1683 = vmatpush2.bf16.msra.mxu0 %v1190
    %1684 = vmatprep.subr.bf16.mxu0 %v1187
    %1685 = vmatpush2.bf16.msra.mxu0 %v1186
    %1686 = vmatprep.subr.bf16.mxu0 %v1183
    %1687 = vmatpush2.bf16.msra.mxu0 %v1182
    %1688 = vmatprep.subr.bf16.mxu0 %v1179
    %1689 = vmatpush2.bf16.msra.mxu0 %v1178
    %1690 = vmatprep.mubr.bf16.mxu0 %v115
    %1691 = vmatmul.mubr.bf16.gmra.mxu0 %v114
    %v1692 = vpop.f32.mrf.mxu0
    %v1693 = vadd.f32 0.0, %v1692
    %v1694 = vpop.f32.mrf.mxu0
    %v1695 = vadd.f32 0.0, %v1694
    %v1696 = vpop.f32.mrf.mxu0
    %v1697 = vpop.f32.mrf.mxu0
    %1698 = vdwg.mxu0
    %1699 = vmatprep.subr.bf16.mxu0 %v1239
    %1700 = vmatpush1.bf16.msra.mxu0 %v1238
    %1701 = vmatprep.subr.bf16.mxu0 %v1235
    %1702 = vmatpush1.bf16.msra.mxu0 %v1234
    %1703 = vmatprep.subr.bf16.mxu0 %v1231
    %1704 = vmatpush1.bf16.msra.mxu0 %v1230
    %1705 = vmatprep.subr.bf16.mxu0 %v1227
    %1706 = vmatpush1.bf16.msra.mxu0 %v1226
    %1707 = vmatprep.subr.bf16.mxu0 %v1223
    %1708 = vmatpush1.bf16.msra.mxu0 %v1222
    %1709 = vmatprep.subr.bf16.mxu0 %v1219
    %1710 = vmatpush1.bf16.msra.mxu0 %v1218
    %1711 = vmatprep.subr.bf16.mxu0 %v1215
    %1712 = vmatpush1.bf16.msra.mxu0 %v1214
    %1713 = vmatprep.subr.bf16.mxu0 %v1211
    %1714 = vmatpush1.bf16.msra.mxu0 %v1210
    %1715 = vmatprep.subr.bf16.mxu0 %v1271
    %1716 = vmatpush2.bf16.msra.mxu0 %v1270
    %1717 = vmatprep.subr.bf16.mxu0 %v1267
    %1718 = vmatpush2.bf16.msra.mxu0 %v1266
    %1719 = vmatprep.subr.bf16.mxu0 %v1263
    %1720 = vmatpush2.bf16.msra.mxu0 %v1262
    %1721 = vmatprep.subr.bf16.mxu0 %v1259
    %1722 = vmatpush2.bf16.msra.mxu0 %v1258
    %1723 = vmatprep.subr.bf16.mxu0 %v1255
    %1724 = vmatpush2.bf16.msra.mxu0 %v1254
    %1725 = vmatprep.subr.bf16.mxu0 %v1251
    %1726 = vmatpush2.bf16.msra.mxu0 %v1250
    %1727 = vmatprep.subr.bf16.mxu0 %v1247
    %1728 = vmatpush2.bf16.msra.mxu0 %v1246
    %1729 = vmatprep.subr.bf16.mxu0 %v1243
    %1730 = vmatpush2.bf16.msra.mxu0 %v1242
    %1731 = vmatprep.mubr.bf16.mxu0 %v117
    %1732 = vmatmul.mubr.bf16.gmra.mxu0 %v116
    %v1733 = vpop.f32.mrf.mxu0
    %v1734 = vadd.f32 %v1693, %v1733
    %v1735 = vpop.f32.mrf.mxu0
    %v1736 = vadd.f32 %v1695, %v1735
    %v1737 = vpop.f32.mrf.mxu0
    %v1738 = vpop.f32.mrf.mxu0
    %1739 = vdwg.mxu0
    %1740 = vmatprep.subr.bf16.mxu0 %v1303
    %1741 = vmatpush1.bf16.msra.mxu0 %v1302
    %1742 = vmatprep.subr.bf16.mxu0 %v1299
    %1743 = vmatpush1.bf16.msra.mxu0 %v1298
    %1744 = vmatprep.subr.bf16.mxu0 %v1295
    %1745 = vmatpush1.bf16.msra.mxu0 %v1294
    %1746 = vmatprep.subr.bf16.mxu0 %v1291
    %1747 = vmatpush1.bf16.msra.mxu0 %v1290
    %1748 = vmatprep.subr.bf16.mxu0 %v1287
    %1749 = vmatpush1.bf16.msra.mxu0 %v1286
    %1750 = vmatprep.subr.bf16.mxu0 %v1283
    %1751 = vmatpush1.bf16.msra.mxu0 %v1282
    %1752 = vmatprep.subr.bf16.mxu0 %v1279
    %1753 = vmatpush1.bf16.msra.mxu0 %v1278
    %1754 = vmatprep.subr.bf16.mxu0 %v1275
    %1755 = vmatpush1.bf16.msra.mxu0 %v1274
    %1756 = vmatprep.subr.bf16.mxu0 %v1335
    %1757 = vmatpush2.bf16.msra.mxu0 %v1334
    %1758 = vmatprep.subr.bf16.mxu0 %v1331
    %1759 = vmatpush2.bf16.msra.mxu0 %v1330
    %1760 = vmatprep.subr.bf16.mxu0 %v1327
    %1761 = vmatpush2.bf16.msra.mxu0 %v1326
    %1762 = vmatprep.subr.bf16.mxu0 %v1323
    %1763 = vmatpush2.bf16.msra.mxu0 %v1322
    %1764 = vmatprep.subr.bf16.mxu0 %v1319
    %1765 = vmatpush2.bf16.msra.mxu0 %v1318
    %1766 = vmatprep.subr.bf16.mxu0 %v1315
    %1767 = vmatpush2.bf16.msra.mxu0 %v1314
    %1768 = vmatprep.subr.bf16.mxu0 %v1311
    %1769 = vmatpush2.bf16.msra.mxu0 %v1310
    %1770 = vmatprep.subr.bf16.mxu0 %v1307
    %1771 = vmatpush2.bf16.msra.mxu0 %v1306
    %1772 = vmatprep.mubr.bf16.mxu0 %v119
    %1773 = vmatmul.mubr.bf16.gmra.mxu0 %v118
    %v1774 = vpop.f32.mrf.mxu0
    %v1775 = vadd.f32 %v1734, %v1774
    %v1776 = vpop.f32.mrf.mxu0
    %v1777 = vadd.f32 %v1736, %v1776
    %v1778 = vpop.f32.mrf.mxu0
    %v1779 = vpop.f32.mrf.mxu0
    %1780 = vdwg.mxu0
    %1781 = vmatprep.subr.bf16.mxu0 %v1367
    %1782 = vmatpush1.bf16.msra.mxu0 %v1366
    %1783 = vmatprep.subr.bf16.mxu0 %v1363
    %1784 = vmatpush1.bf16.msra.mxu0 %v1362
    %1785 = vmatprep.subr.bf16.mxu0 %v1359
    %1786 = vmatpush1.bf16.msra.mxu0 %v1358
    %1787 = vmatprep.subr.bf16.mxu0 %v1355
    %1788 = vmatpush1.bf16.msra.mxu0 %v1354
    %1789 = vmatprep.subr.bf16.mxu0 %v1351
    %1790 = vmatpush1.bf16.msra.mxu0 %v1350
    %1791 = vmatprep.subr.bf16.mxu0 %v1347
    %1792 = vmatpush1.bf16.msra.mxu0 %v1346
    %1793 = vmatprep.subr.bf16.mxu0 %v1343
    %1794 = vmatpush1.bf16.msra.mxu0 %v1342
    %1795 = vmatprep.subr.bf16.mxu0 %v1339
    %1796 = vmatpush1.bf16.msra.mxu0 %v1338
    %1797 = vmatprep.subr.bf16.mxu0 %v1399
    %1798 = vmatpush2.bf16.msra.mxu0 %v1398
    %1799 = vmatprep.subr.bf16.mxu0 %v1395
    %1800 = vmatpush2.bf16.msra.mxu0 %v1394
    %1801 = vmatprep.subr.bf16.mxu0 %v1391
    %1802 = vmatpush2.bf16.msra.mxu0 %v1390
    %1803 = vmatprep.subr.bf16.mxu0 %v1387
    %1804 = vmatpush2.bf16.msra.mxu0 %v1386
    %1805 = vmatprep.subr.bf16.mxu0 %v1383
    %1806 = vmatpush2.bf16.msra.mxu0 %v1382
    %1807 = vmatprep.subr.bf16.mxu0 %v1379
    %1808 = vmatpush2.bf16.msra.mxu0 %v1378
    %1809 = vmatprep.subr.bf16.mxu0 %v1375
    %1810 = vmatpush2.bf16.msra.mxu0 %v1374
    %1811 = vmatprep.subr.bf16.mxu0 %v1371
    %1812 = vmatpush2.bf16.msra.mxu0 %v1370
    %1813 = vmatprep.mubr.bf16.mxu0 %v121
    %1814 = vmatmul.mubr.bf16.gmra.mxu0 %v120
    %v1815 = vpop.f32.mrf.mxu0
    %v1816 = vadd.f32 %v1775, %v1815
    %v1817 = vpop.f32.mrf.mxu0
    %v1818 = vadd.f32 %v1777, %v1817
    %v1819 = vpop.f32.mrf.mxu0
    %v1820 = vpop.f32.mrf.mxu0
    %1821 = vdwg.mxu0
    %1822 = vmatprep.subr.bf16.mxu0 %v1177
    %1823 = vmatpush1.bf16.msra.mxu0 %v1176
    %1824 = vmatprep.subr.bf16.mxu0 %v1173
    %1825 = vmatpush1.bf16.msra.mxu0 %v1172
    %1826 = vmatprep.subr.bf16.mxu0 %v1169
    %1827 = vmatpush1.bf16.msra.mxu0 %v1168
    %1828 = vmatprep.subr.bf16.mxu0 %v1165
    %1829 = vmatpush1.bf16.msra.mxu0 %v1164
    %1830 = vmatprep.subr.bf16.mxu0 %v1161
    %1831 = vmatpush1.bf16.msra.mxu0 %v1160
    %1832 = vmatprep.subr.bf16.mxu0 %v1157
    %1833 = vmatpush1.bf16.msra.mxu0 %v1156
    %1834 = vmatprep.subr.bf16.mxu0 %v1153
    %1835 = vmatpush1.bf16.msra.mxu0 %v1152
    %1836 = vmatprep.subr.bf16.mxu0 %v1149
    %1837 = vmatpush1.bf16.msra.mxu0 %v1148
    %1838 = vmatprep.subr.bf16.mxu0 %v1209
    %1839 = vmatpush2.bf16.msra.mxu0 %v1208
    %1840 = vmatprep.subr.bf16.mxu0 %v1205
    %1841 = vmatpush2.bf16.msra.mxu0 %v1204
    %1842 = vmatprep.subr.bf16.mxu0 %v1201
    %1843 = vmatpush2.bf16.msra.mxu0 %v1200
    %1844 = vmatprep.subr.bf16.mxu0 %v1197
    %1845 = vmatpush2.bf16.msra.mxu0 %v1196
    %1846 = vmatprep.subr.bf16.mxu0 %v1193
    %1847 = vmatpush2.bf16.msra.mxu0 %v1192
    %1848 = vmatprep.subr.bf16.mxu0 %v1189
    %1849 = vmatpush2.bf16.msra.mxu0 %v1188
    %1850 = vmatprep.subr.bf16.mxu0 %v1185
    %1851 = vmatpush2.bf16.msra.mxu0 %v1184
    %1852 = vmatprep.subr.bf16.mxu0 %v1181
    %1853 = vmatpush2.bf16.msra.mxu0 %v1180
    %1854 = vmatprep.mubr.bf16.mxu0 %v115
    %1855 = vmatmul.mubr.bf16.gmra.mxu0 %v114
    %v1856 = vpop.f32.mrf.mxu0
    %v1857 = vadd.f32 0.0, %v1856
    %v1858 = vpop.f32.mrf.mxu0
    %v1859 = vadd.f32 0.0, %v1858
    %v1860 = vpop.f32.mrf.mxu0
    %v1861 = vpop.f32.mrf.mxu0
    %1862 = vdwg.mxu0
    %1863 = vmatprep.subr.bf16.mxu0 %v1241
    %1864 = vmatpush1.bf16.msra.mxu0 %v1240
    %1865 = vmatprep.subr.bf16.mxu0 %v1237
    %1866 = vmatpush1.bf16.msra.mxu0 %v1236
    %1867 = vmatprep.subr.bf16.mxu0 %v1233
    %1868 = vmatpush1.bf16.msra.mxu0 %v1232
    %1869 = vmatprep.subr.bf16.mxu0 %v1229
    %1870 = vmatpush1.bf16.msra.mxu0 %v1228
    %1871 = vmatprep.subr.bf16.mxu0 %v1225
    %1872 = vmatpush1.bf16.msra.mxu0 %v1224
    %1873 = vmatprep.subr.bf16.mxu0 %v1221
    %1874 = vmatpush1.bf16.msra.mxu0 %v1220
    %1875 = vmatprep.subr.bf16.mxu0 %v1217
    %1876 = vmatpush1.bf16.msra.mxu0 %v1216
    %1877 = vmatprep.subr.bf16.mxu0 %v1213
    %1878 = vmatpush1.bf16.msra.mxu0 %v1212
    %1879 = vmatprep.subr.bf16.mxu0 %v1273
    %1880 = vmatpush2.bf16.msra.mxu0 %v1272
    %1881 = vmatprep.subr.bf16.mxu0 %v1269
    %1882 = vmatpush2.bf16.msra.mxu0 %v1268
    %1883 = vmatprep.subr.bf16.mxu0 %v1265
    %1884 = vmatpush2.bf16.msra.mxu0 %v1264
    %1885 = vmatprep.subr.bf16.mxu0 %v1261
    %1886 = vmatpush2.bf16.msra.mxu0 %v1260
    %1887 = vmatprep.subr.bf16.mxu0 %v1257
    %1888 = vmatpush2.bf16.msra.mxu0 %v1256
    %1889 = vmatprep.subr.bf16.mxu0 %v1253
    %1890 = vmatpush2.bf16.msra.mxu0 %v1252
    %1891 = vmatprep.subr.bf16.mxu0 %v1249
    %1892 = vmatpush2.bf16.msra.mxu0 %v1248
    %1893 = vmatprep.subr.bf16.mxu0 %v1245
    %1894 = vmatpush2.bf16.msra.mxu0 %v1244
    %1895 = vmatprep.mubr.bf16.mxu0 %v117
    %1896 = vmatmul.mubr.bf16.gmra.mxu0 %v116
    %v1897 = vpop.f32.mrf.mxu0
    %v1898 = vadd.f32 %v1857, %v1897
    %v1899 = vpop.f32.mrf.mxu0
    %v1900 = vadd.f32 %v1859, %v1899
    %v1901 = vpop.f32.mrf.mxu0
    %v1902 = vpop.f32.mrf.mxu0
    %1903 = vdwg.mxu0
    %1904 = vmatprep.subr.bf16.mxu0 %v1305
    %1905 = vmatpush1.bf16.msra.mxu0 %v1304
    %1906 = vmatprep.subr.bf16.mxu0 %v1301
    %1907 = vmatpush1.bf16.msra.mxu0 %v1300
    %1908 = vmatprep.subr.bf16.mxu0 %v1297
    %1909 = vmatpush1.bf16.msra.mxu0 %v1296
    %1910 = vmatprep.subr.bf16.mxu0 %v1293
    %1911 = vmatpush1.bf16.msra.mxu0 %v1292
    %1912 = vmatprep.subr.bf16.mxu0 %v1289
    %1913 = vmatpush1.bf16.msra.mxu0 %v1288
    %1914 = vmatprep.subr.bf16.mxu0 %v1285
    %1915 = vmatpush1.bf16.msra.mxu0 %v1284
    %1916 = vmatprep.subr.bf16.mxu0 %v1281
    %1917 = vmatpush1.bf16.msra.mxu0 %v1280
    %1918 = vmatprep.subr.bf16.mxu0 %v1277
    %1919 = vmatpush1.bf16.msra.mxu0 %v1276
    %1920 = vmatprep.subr.bf16.mxu0 %v1337
    %1921 = vmatpush2.bf16.msra.mxu0 %v1336
    %1922 = vmatprep.subr.bf16.mxu0 %v1333
    %1923 = vmatpush2.bf16.msra.mxu0 %v1332
    %1924 = vmatprep.subr.bf16.mxu0 %v1329
    %1925 = vmatpush2.bf16.msra.mxu0 %v1328
    %1926 = vmatprep.subr.bf16.mxu0 %v1325
    %1927 = vmatpush2.bf16.msra.mxu0 %v1324
    %1928 = vmatprep.subr.bf16.mxu0 %v1321
    %1929 = vmatpush2.bf16.msra.mxu0 %v1320
    %1930 = vmatprep.subr.bf16.mxu0 %v1317
    %1931 = vmatpush2.bf16.msra.mxu0 %v1316
    %1932 = vmatprep.subr.bf16.mxu0 %v1313
    %1933 = vmatpush2.bf16.msra.mxu0 %v1312
    %1934 = vmatprep.subr.bf16.mxu0 %v1309
    %1935 = vmatpush2.bf16.msra.mxu0 %v1308
    %1936 = vmatprep.mubr.bf16.mxu0 %v119
    %1937 = vmatmul.mubr.bf16.gmra.mxu0 %v118
    %v1938 = vpop.f32.mrf.mxu0
    %v1939 = vadd.f32 %v1898, %v1938
    %v1940 = vpop.f32.mrf.mxu0
    %v1941 = vadd.f32 %v1900, %v1940
    %v1942 = vpop.f32.mrf.mxu0
    %v1943 = vpop.f32.mrf.mxu0
    %1944 = vdwg.mxu0
    %1945 = vmatprep.subr.bf16.mxu0 %v1369
    %1946 = vmatpush1.bf16.msra.mxu0 %v1368
    %1947 = vmatprep.subr.bf16.mxu0 %v1365
    %1948 = vmatpush1.bf16.msra.mxu0 %v1364
    %1949 = vmatprep.subr.bf16.mxu0 %v1361
    %1950 = vmatpush1.bf16.msra.mxu0 %v1360
    %1951 = vmatprep.subr.bf16.mxu0 %v1357
    %1952 = vmatpush1.bf16.msra.mxu0 %v1356
    %1953 = vmatprep.subr.bf16.mxu0 %v1353
    %1954 = vmatpush1.bf16.msra.mxu0 %v1352
    %1955 = vmatprep.subr.bf16.mxu0 %v1349
    %1956 = vmatpush1.bf16.msra.mxu0 %v1348
    %1957 = vmatprep.subr.bf16.mxu0 %v1345
    %1958 = vmatpush1.bf16.msra.mxu0 %v1344
    %1959 = vmatprep.subr.bf16.mxu0 %v1341
    %1960 = vmatpush1.bf16.msra.mxu0 %v1340
    %1961 = vmatprep.subr.bf16.mxu0 %v1401
    %1962 = vmatpush2.bf16.msra.mxu0 %v1400
    %1963 = vmatprep.subr.bf16.mxu0 %v1397
    %1964 = vmatpush2.bf16.msra.mxu0 %v1396
    %1965 = vmatprep.subr.bf16.mxu0 %v1393
    %1966 = vmatpush2.bf16.msra.mxu0 %v1392
    %1967 = vmatprep.subr.bf16.mxu0 %v1389
    %1968 = vmatpush2.bf16.msra.mxu0 %v1388
    %1969 = vmatprep.subr.bf16.mxu0 %v1385
    %1970 = vmatpush2.bf16.msra.mxu0 %v1384
    %1971 = vmatprep.subr.bf16.mxu0 %v1381
    %1972 = vmatpush2.bf16.msra.mxu0 %v1380
    %1973 = vmatprep.subr.bf16.mxu0 %v1377
    %1974 = vmatpush2.bf16.msra.mxu0 %v1376
    %1975 = vmatprep.subr.bf16.mxu0 %v1373
    %1976 = vmatpush2.bf16.msra.mxu0 %v1372
    %1977 = vmatprep.mubr.bf16.mxu0 %v121
    %1978 = vmatmul.mubr.bf16.gmra.mxu0 %v120
    %v1979 = vpop.f32.mrf.mxu0
    %v1980 = vadd.f32 %v1939, %v1979
    %v1981 = vpop.f32.mrf.mxu0
    %v1982 = vadd.f32 %v1941, %v1981
    %v1983 = vpop.f32.mrf.mxu0
    %v1984 = vpop.f32.mrf.mxu0
    %1985 = vdwg.mxu0
    %p1986 = scmp.eq.s32.totalorder 0, 0
    // Predicated region
    $region42: #{tpu_custom_call.1} parent=1 // pred_check
      %p1987 = pneg %p1986
    $region43: #{tpu_custom_call.1} parent=1 // pred_check_branch
      %1989 = sbr.rel (%p1987) target = $region45
    $region44: #{tpu_custom_call.1} parent=1 // pred_region
      %v1994 = vcombine.low %v1816, %v1818
      %v1995 = vcombine.low %v1980, %v1982
      %v1997 = vunpack.c.l.s4 1983009808
      %v1998 = vunpack.c.0.s8 %v1997
      %v1999 = vlaneseq
      %v2000 = vshrl.u32 %v1999, 7
      %v2001 = vsub.s32 %v1998, %v2000
      %v2002 = vrot.slane %v1994, %v2001
      %v2004 = vunpack.c.l.s4 1983009808
      %v2005 = vunpack.c.0.s8 %v2004
      %v2006 = vlaneseq
      %v2007 = vshrl.u32 %v2006, 7
      %v2008 = vsub.s32 %v2005, %v2007
      %v2009 = vrot.slane %v1995, %v2008
      %v2010 = vcombine.low %v2002, %v2009
      %2012 = vst [vmem:[#allocation2] sm:$0xff] %v2010
    $region45: #{tpu_custom_call.1} parent=1 // pred_fallthru
      _
    %p2013 = scmp.gt.s32.totalorder 0, 0
    // Predicated region
    $region46: #{tpu_custom_call.1} parent=1 // pred_check
      %p2014 = pneg %p2013
    $region47: #{tpu_custom_call.1} parent=1 // pred_check_branch
      %2016 = sbr.rel (%p2014) target = $region49
    $region48: #{tpu_custom_call.1} parent=1 // pred_region
      %v2017 = vld [vmem:[#allocation2] sm:$0xff]
      %v2022 = vcombine.low %v1816, %v1818
      %v2023 = vcombine.low %v1980, %v1982
      %v2025 = vunpack.c.l.s4 1983009808
      %v2026 = vunpack.c.0.s8 %v2025
      %v2027 = vlaneseq
      %v2028 = vshrl.u32 %v2027, 7
      %v2029 = vsub.s32 %v2026, %v2028
      %v2030 = vrot.slane %v2022, %v2029
      %v2032 = vunpack.c.l.s4 1983009808
      %v2033 = vunpack.c.0.s8 %v2032
      %v2034 = vlaneseq
      %v2035 = vshrl.u32 %v2034, 7
      %v2036 = vsub.s32 %v2033, %v2035
      %v2037 = vrot.slane %v2023, %v2036
      %v2038 = vcombine.low %v2030, %v2037
      %v2040 = vadd.f32 %v2017, %v2038
      %2041 = vst [vmem:[#allocation2] sm:$0xff] %v2040
    $region49: #{tpu_custom_call.1} parent=1 // pred_fallthru
      _
    // Predicated region
    $region50: #{tpu_custom_call.1} parent=1 // pred_check
      %p2042 = pneg %p1986
    $region51: #{tpu_custom_call.1} parent=1 // pred_check_branch
      %2044 = sbr.rel (%p2042) target = $region53
    $region52: #{tpu_custom_call.1} parent=1 // pred_region
      %v2045 = vld [vmem:[#allocation2] sm:$0xff]
      %v2046 = vld [vmem:[%s2] sm:$0xf]
      %v2048 = vlaneseq
      %v2049 = vshrl.u32 %v2048, 7
      %v2050 = vsub.s32 0, %v2049
      %v2051 = vrot.slane %v2046, %v2050
      %v2052 = vlaneseq
      %v2053 = vshrl.u32 %v2052, 7
      %v2054 = vsub.s32 1, %v2053
      %v2055 = vrot.slane %v2046, %v2054
      %v2056 = vlaneseq
      %v2057 = vshrl.u32 %v2056, 7
      %v2058 = vsub.s32 2, %v2057
      %v2059 = vrot.slane %v2046, %v2058
      %v2060 = vlaneseq
      %v2061 = vshrl.u32 %v2060, 7
      %v2062 = vsub.s32 3, %v2061
      %v2063 = vrot.slane %v2046, %v2062
      %v2064 = vcombine.low %v2051, %v2055
      %v2065 = vcombine.low %v2059, %v2063
      %v2067 = vunpack.c.l.s4 1983009808
      %v2068 = vunpack.c.0.s8 %v2067
      %v2069 = vlaneseq
      %v2070 = vshrl.u32 %v2069, 7
      %v2071 = vsub.s32 %v2068, %v2070
      %v2072 = vrot.slane %v2064, %v2071
      %v2074 = vunpack.c.l.s4 1983009808
      %v2075 = vunpack.c.0.s8 %v2074
      %v2076 = vlaneseq
      %v2077 = vshrl.u32 %v2076, 7
      %v2078 = vsub.s32 %v2075, %v2077
      %v2079 = vrot.slane %v2065, %v2078
      %v2080 = vcombine.low %v2072, %v2079
      %v2082 = vadd.f32 %v2045, %v2080
      %vm2083 = vcmp.gt.f32.partialorder %v2082, 0.0
      %v2084 = vmul.f32 %v2082, 0.01
      %v2085 = vsel %vm2083, %v2082, %v2084
      %v2087 = vcombine.high %v2085, %v2085
      %v2089 = vunpack.c.l.s4 1983009808
      %v2090 = vunpack.c.0.s8 %v2089
      %v2091 = vlaneseq
      %v2092 = vshrl.u32 %v2091, 7
      %v2093 = vsub.s32 %v2090, %v2092
      %v2094 = vrot.slane %v2085, %v2093
      %v2096 = vunpack.c.l.s4 1983009808
      %v2097 = vunpack.c.0.s8 %v2096
      %v2098 = vlaneseq
      %v2099 = vshrl.u32 %v2098, 7
      %v2100 = vsub.s32 %v2097, %v2099
      %v2101 = vrot.slane %v2087, %v2100
      %v2102 = vcombine.high %v2094, %v2094
      %v2103 = vcombine.high %v2101, %v2101
      %v2108 = vpack.c.bf16 %v2094, %v2094
      %v2109 = vpack.c.bf16 %v2102, %v2102
      %v2110 = vpack.c.bf16 %v2101, %v2101
      %v2111 = vpack.c.bf16 %v2103, %v2103
      %v2112 = vld [vmem:[#allocation9] sm:$0xff]
      %v2113 = vld [vmem:[#allocation9 + $0x8] sm:$0xff]
      %v2114 = vld [vmem:[#allocation9 + $0x10] sm:$0xff]
      %v2115 = vld [vmem:[#allocation9 + $0x18] sm:$0xff]
      %v2116 = vld [vmem:[#allocation9 + $0x20] sm:$0xff]
      %v2117 = vld [vmem:[#allocation9 + $0x28] sm:$0xff]
      %v2118 = vld [vmem:[#allocation9 + $0x30] sm:$0xff]
      %v2119 = vld [vmem:[#allocation9 + $0x38] sm:$0xff]
      %v2120 = vld [vmem:[#allocation9 + $0x40] sm:$0xff]
      %v2121 = vld [vmem:[#allocation9 + $0x48] sm:$0xff]
      %v2122 = vld [vmem:[#allocation9 + $0x50] sm:$0xff]
      %v2123 = vld [vmem:[#allocation9 + $0x58] sm:$0xff]
      %v2124 = vld [vmem:[#allocation9 + $0x60] sm:$0xff]
      %v2125 = vld [vmem:[#allocation9 + $0x68] sm:$0xff]
      %v2126 = vld [vmem:[#allocation9 + $0x70] sm:$0xff]
      %v2127 = vld [vmem:[#allocation9 + $0x78] sm:$0xff]
      %v2128 = vld [vmem:[#allocation9 + $0x80] sm:$0xff]
      %v2129 = vld [vmem:[#allocation9 + $0x88] sm:$0xff]
      %v2130 = vld [vmem:[#allocation9 + $0x90] sm:$0xff]
      %v2131 = vld [vmem:[#allocation9 + $0x98] sm:$0xff]
      %v2132 = vld [vmem:[#allocation9 + $0xa0] sm:$0xff]
      %v2133 = vld [vmem:[#allocation9 + $0xa8] sm:$0xff]
      %v2134 = vld [vmem:[#allocation9 + $0xb0] sm:$0xff]
      %v2135 = vld [vmem:[#allocation9 + $0xb8] sm:$0xff]
      %v2136 = vld [vmem:[#allocation9 + $0xc0] sm:$0xff]
      %v2137 = vld [vmem:[#allocation9 + $0xc8] sm:$0xff]
      %v2138 = vld [vmem:[#allocation9 + $0xd0] sm:$0xff]
      %v2139 = vld [vmem:[#allocation9 + $0xd8] sm:$0xff]
      %v2140 = vld [vmem:[#allocation9 + $0xe0] sm:$0xff]
      %v2141 = vld [vmem:[#allocation9 + $0xe8] sm:$0xff]
      %v2142 = vld [vmem:[#allocation9 + $0xf0] sm:$0xff]
      %v2143 = vld [vmem:[#allocation9 + $0xf8] sm:$0xff]
      %v2144 = vld [vmem:[#allocation9 + $0x100] sm:$0xff]
      %v2145 = vld [vmem:[#allocation9 + $0x108] sm:$0xff]
      %v2146 = vld [vmem:[#allocation9 + $0x110] sm:$0xff]
      %v2147 = vld [vmem:[#allocation9 + $0x118] sm:$0xff]
      %v2148 = vld [vmem:[#allocation9 + $0x120] sm:$0xff]
      %v2149 = vld [vmem:[#allocation9 + $0x128] sm:$0xff]
      %v2150 = vld [vmem:[#allocation9 + $0x130] sm:$0xff]
      %v2151 = vld [vmem:[#allocation9 + $0x138] sm:$0xff]
      %v2152 = vld [vmem:[#allocation9 + $0x140] sm:$0xff]
      %v2153 = vld [vmem:[#allocation9 + $0x148] sm:$0xff]
      %v2154 = vld [vmem:[#allocation9 + $0x150] sm:$0xff]
      %v2155 = vld [vmem:[#allocation9 + $0x158] sm:$0xff]
      %v2156 = vld [vmem:[#allocation9 + $0x160] sm:$0xff]
      %v2157 = vld [vmem:[#allocation9 + $0x168] sm:$0xff]
      %v2158 = vld [vmem:[#allocation9 + $0x170] sm:$0xff]
      %v2159 = vld [vmem:[#allocation9 + $0x178] sm:$0xff]
      %v2160 = vld [vmem:[#allocation9 + $0x180] sm:$0xff]
      %v2161 = vld [vmem:[#allocation9 + $0x188] sm:$0xff]
      %v2162 = vld [vmem:[#allocation9 + $0x190] sm:$0xff]
      %v2163 = vld [vmem:[#allocation9 + $0x198] sm:$0xff]
      %v2164 = vld [vmem:[#allocation9 + $0x1a0] sm:$0xff]
      %v2165 = vld [vmem:[#allocation9 + $0x1a8] sm:$0xff]
      %v2166 = vld [vmem:[#allocation9 + $0x1b0] sm:$0xff]
      %v2167 = vld [vmem:[#allocation9 + $0x1b8] sm:$0xff]
      %v2168 = vld [vmem:[#allocation9 + $0x1c0] sm:$0xff]
      %v2169 = vld [vmem:[#allocation9 + $0x1c8] sm:$0xff]
      %v2170 = vld [vmem:[#allocation9 + $0x1d0] sm:$0xff]
      %v2171 = vld [vmem:[#allocation9 + $0x1d8] sm:$0xff]
      %v2172 = vld [vmem:[#allocation9 + $0x1e0] sm:$0xff]
      %v2173 = vld [vmem:[#allocation9 + $0x1e8] sm:$0xff]
      %v2174 = vld [vmem:[#allocation9 + $0x1f0] sm:$0xff]
      %v2175 = vld [vmem:[#allocation9 + $0x1f8] sm:$0xff]
      %v2176 = vld [vmem:[%s4] sm:$0x3]
      %v2178 = vlaneseq
      %v2179 = vshrl.u32 %v2178, 7
      %v2180 = vsub.s32 0, %v2179
      %v2181 = vrot.slane %v2176, %v2180
      %v2182 = vlaneseq
      %v2183 = vshrl.u32 %v2182, 7
      %v2184 = vsub.s32 1, %v2183
      %v2185 = vrot.slane %v2176, %v2184
      %v2252 = vunpack.c.l.b16 %v2112
      %v2253 = vunpack.c.h.b16 %v2112
      %v2254 = vunpack.c.l.b16 %v2113
      %v2255 = vunpack.c.h.b16 %v2113
      %v2256 = vunpack.c.l.b16 %v2114
      %v2257 = vunpack.c.h.b16 %v2114
      %v2258 = vunpack.c.l.b16 %v2115
      %v2259 = vunpack.c.h.b16 %v2115
      %v2260 = vunpack.c.l.b16 %v2116
      %v2261 = vunpack.c.h.b16 %v2116
      %v2262 = vunpack.c.l.b16 %v2117
      %v2263 = vunpack.c.h.b16 %v2117
      %v2264 = vunpack.c.l.b16 %v2118
      %v2265 = vunpack.c.h.b16 %v2118
      %v2266 = vunpack.c.l.b16 %v2119
      %v2267 = vunpack.c.h.b16 %v2119
      %v2268 = vunpack.c.l.b16 %v2120
      %v2269 = vunpack.c.h.b16 %v2120
      %v2270 = vunpack.c.l.b16 %v2121
      %v2271 = vunpack.c.h.b16 %v2121
      %v2272 = vunpack.c.l.b16 %v2122
      %v2273 = vunpack.c.h.b16 %v2122
      %v2274 = vunpack.c.l.b16 %v2123
      %v2275 = vunpack.c.h.b16 %v2123
      %v2276 = vunpack.c.l.b16 %v2124
      %v2277 = vunpack.c.h.b16 %v2124
      %v2278 = vunpack.c.l.b16 %v2125
      %v2279 = vunpack.c.h.b16 %v2125
      %v2280 = vunpack.c.l.b16 %v2126
      %v2281 = vunpack.c.h.b16 %v2126
      %v2282 = vunpack.c.l.b16 %v2127
      %v2283 = vunpack.c.h.b16 %v2127
      %v2284 = vunpack.c.l.b16 %v2128
      %v2285 = vunpack.c.h.b16 %v2128
      %v2286 = vunpack.c.l.b16 %v2129
      %v2287 = vunpack.c.h.b16 %v2129
      %v2288 = vunpack.c.l.b16 %v2130
      %v2289 = vunpack.c.h.b16 %v2130
      %v2290 = vunpack.c.l.b16 %v2131
      %v2291 = vunpack.c.h.b16 %v2131
      %v2292 = vunpack.c.l.b16 %v2132
      %v2293 = vunpack.c.h.b16 %v2132
      %v2294 = vunpack.c.l.b16 %v2133
      %v2295 = vunpack.c.h.b16 %v2133
      %v2296 = vunpack.c.l.b16 %v2134
      %v2297 = vunpack.c.h.b16 %v2134
      %v2298 = vunpack.c.l.b16 %v2135
      %v2299 = vunpack.c.h.b16 %v2135
      %v2300 = vunpack.c.l.b16 %v2136
      %v2301 = vunpack.c.h.b16 %v2136
      %v2302 = vunpack.c.l.b16 %v2137
      %v2303 = vunpack.c.h.b16 %v2137
      %v2304 = vunpack.c.l.b16 %v2138
      %v2305 = vunpack.c.h.b16 %v2138
      %v2306 = vunpack.c.l.b16 %v2139
      %v2307 = vunpack.c.h.b16 %v2139
      %v2308 = vunpack.c.l.b16 %v2140
      %v2309 = vunpack.c.h.b16 %v2140
      %v2310 = vunpack.c.l.b16 %v2141
      %v2311 = vunpack.c.h.b16 %v2141
      %v2312 = vunpack.c.l.b16 %v2142
      %v2313 = vunpack.c.h.b16 %v2142
      %v2314 = vunpack.c.l.b16 %v2143
      %v2315 = vunpack.c.h.b16 %v2143
      %v2316 = vunpack.c.l.b16 %v2144
      %v2317 = vunpack.c.h.b16 %v2144
      %v2318 = vunpack.c.l.b16 %v2145
      %v2319 = vunpack.c.h.b16 %v2145
      %v2320 = vunpack.c.l.b16 %v2146
      %v2321 = vunpack.c.h.b16 %v2146
      %v2322 = vunpack.c.l.b16 %v2147
      %v2323 = vunpack.c.h.b16 %v2147
      %v2324 = vunpack.c.l.b16 %v2148
      %v2325 = vunpack.c.h.b16 %v2148
      %v2326 = vunpack.c.l.b16 %v2149
      %v2327 = vunpack.c.h.b16 %v2149
      %v2328 = vunpack.c.l.b16 %v2150
      %v2329 = vunpack.c.h.b16 %v2150
      %v2330 = vunpack.c.l.b16 %v2151
      %v2331 = vunpack.c.h.b16 %v2151
      %v2332 = vunpack.c.l.b16 %v2152
      %v2333 = vunpack.c.h.b16 %v2152
      %v2334 = vunpack.c.l.b16 %v2153
      %v2335 = vunpack.c.h.b16 %v2153
      %v2336 = vunpack.c.l.b16 %v2154
      %v2337 = vunpack.c.h.b16 %v2154
      %v2338 = vunpack.c.l.b16 %v2155
      %v2339 = vunpack.c.h.b16 %v2155
      %v2340 = vunpack.c.l.b16 %v2156
      %v2341 = vunpack.c.h.b16 %v2156
      %v2342 = vunpack.c.l.b16 %v2157
      %v2343 = vunpack.c.h.b16 %v2157
      %v2344 = vunpack.c.l.b16 %v2158
      %v2345 = vunpack.c.h.b16 %v2158
      %v2346 = vunpack.c.l.b16 %v2159
      %v2347 = vunpack.c.h.b16 %v2159
      %v2348 = vunpack.c.l.b16 %v2160
      %v2349 = vunpack.c.h.b16 %v2160
      %v2350 = vunpack.c.l.b16 %v2161
      %v2351 = vunpack.c.h.b16 %v2161
      %v2352 = vunpack.c.l.b16 %v2162
      %v2353 = vunpack.c.h.b16 %v2162
      %v2354 = vunpack.c.l.b16 %v2163
      %v2355 = vunpack.c.h.b16 %v2163
      %v2356 = vunpack.c.l.b16 %v2164
      %v2357 = vunpack.c.h.b16 %v2164
      %v2358 = vunpack.c.l.b16 %v2165
      %v2359 = vunpack.c.h.b16 %v2165
      %v2360 = vunpack.c.l.b16 %v2166
      %v2361 = vunpack.c.h.b16 %v2166
      %v2362 = vunpack.c.l.b16 %v2167
      %v2363 = vunpack.c.h.b16 %v2167
      %v2364 = vunpack.c.l.b16 %v2168
      %v2365 = vunpack.c.h.b16 %v2168
      %v2366 = vunpack.c.l.b16 %v2169
      %v2367 = vunpack.c.h.b16 %v2169
      %v2368 = vunpack.c.l.b16 %v2170
      %v2369 = vunpack.c.h.b16 %v2170
      %v2370 = vunpack.c.l.b16 %v2171
      %v2371 = vunpack.c.h.b16 %v2171
      %v2372 = vunpack.c.l.b16 %v2172
      %v2373 = vunpack.c.h.b16 %v2172
      %v2374 = vunpack.c.l.b16 %v2173
      %v2375 = vunpack.c.h.b16 %v2173
      %v2376 = vunpack.c.l.b16 %v2174
      %v2377 = vunpack.c.h.b16 %v2174
      %v2378 = vunpack.c.l.b16 %v2175
      %v2379 = vunpack.c.h.b16 %v2175
      %v2380 = vpack.c.b16 %v2254, %v2252
      %v2381 = vpack.c.b16 %v2255, %v2253
      %v2382 = vpack.c.b16 %v2258, %v2256
      %v2383 = vpack.c.b16 %v2259, %v2257
      %v2384 = vpack.c.b16 %v2262, %v2260
      %v2385 = vpack.c.b16 %v2263, %v2261
      %v2386 = vpack.c.b16 %v2266, %v2264
      %v2387 = vpack.c.b16 %v2267, %v2265
      %v2388 = vpack.c.b16 %v2270, %v2268
      %v2389 = vpack.c.b16 %v2271, %v2269
      %v2390 = vpack.c.b16 %v2274, %v2272
      %v2391 = vpack.c.b16 %v2275, %v2273
      %v2392 = vpack.c.b16 %v2278, %v2276
      %v2393 = vpack.c.b16 %v2279, %v2277
      %v2394 = vpack.c.b16 %v2282, %v2280
      %v2395 = vpack.c.b16 %v2283, %v2281
      %v2396 = vpack.c.b16 %v2286, %v2284
      %v2397 = vpack.c.b16 %v2287, %v2285
      %v2398 = vpack.c.b16 %v2290, %v2288
      %v2399 = vpack.c.b16 %v2291, %v2289
      %v2400 = vpack.c.b16 %v2294, %v2292
      %v2401 = vpack.c.b16 %v2295, %v2293
      %v2402 = vpack.c.b16 %v2298, %v2296
      %v2403 = vpack.c.b16 %v2299, %v2297
      %v2404 = vpack.c.b16 %v2302, %v2300
      %v2405 = vpack.c.b16 %v2303, %v2301
      %v2406 = vpack.c.b16 %v2306, %v2304
      %v2407 = vpack.c.b16 %v2307, %v2305
      %v2408 = vpack.c.b16 %v2310, %v2308
      %v2409 = vpack.c.b16 %v2311, %v2309
      %v2410 = vpack.c.b16 %v2314, %v2312
      %v2411 = vpack.c.b16 %v2315, %v2313
      %v2412 = vpack.c.b16 %v2318, %v2316
      %v2413 = vpack.c.b16 %v2319, %v2317
      %v2414 = vpack.c.b16 %v2322, %v2320
      %v2415 = vpack.c.b16 %v2323, %v2321
      %v2416 = vpack.c.b16 %v2326, %v2324
      %v2417 = vpack.c.b16 %v2327, %v2325
      %v2418 = vpack.c.b16 %v2330, %v2328
      %v2419 = vpack.c.b16 %v2331, %v2329
      %v2420 = vpack.c.b16 %v2334, %v2332
      %v2421 = vpack.c.b16 %v2335, %v2333
      %v2422 = vpack.c.b16 %v2338, %v2336
      %v2423 = vpack.c.b16 %v2339, %v2337
      %v2424 = vpack.c.b16 %v2342, %v2340
      %v2425 = vpack.c.b16 %v2343, %v2341
      %v2426 = vpack.c.b16 %v2346, %v2344
      %v2427 = vpack.c.b16 %v2347, %v2345
      %v2428 = vpack.c.b16 %v2350, %v2348
      %v2429 = vpack.c.b16 %v2351, %v2349
      %v2430 = vpack.c.b16 %v2354, %v2352
      %v2431 = vpack.c.b16 %v2355, %v2353
      %v2432 = vpack.c.b16 %v2358, %v2356
      %v2433 = vpack.c.b16 %v2359, %v2357
      %v2434 = vpack.c.b16 %v2362, %v2360
      %v2435 = vpack.c.b16 %v2363, %v2361
      %v2436 = vpack.c.b16 %v2366, %v2364
      %v2437 = vpack.c.b16 %v2367, %v2365
      %v2438 = vpack.c.b16 %v2370, %v2368
      %v2439 = vpack.c.b16 %v2371, %v2369
      %v2440 = vpack.c.b16 %v2374, %v2372
      %v2441 = vpack.c.b16 %v2375, %v2373
      %v2442 = vpack.c.b16 %v2378, %v2376
      %v2443 = vpack.c.b16 %v2379, %v2377
      %2508 = vmatprep.subr.bf16.mxu0 %v2395
      %2509 = vmatpush1.bf16.msra.mxu0 %v2394
      %2510 = vmatprep.subr.bf16.mxu0 %v2393
      %2511 = vmatpush1.bf16.msra.mxu0 %v2392
      %2512 = vmatprep.subr.bf16.mxu0 %v2391
      %2513 = vmatpush1.bf16.msra.mxu0 %v2390
      %2514 = vmatprep.subr.bf16.mxu0 %v2389
      %2515 = vmatpush1.bf16.msra.mxu0 %v2388
      %2516 = vmatprep.subr.bf16.mxu0 %v2387
      %2517 = vmatpush1.bf16.msra.mxu0 %v2386
      %2518 = vmatprep.subr.bf16.mxu0 %v2385
      %2519 = vmatpush1.bf16.msra.mxu0 %v2384
      %2520 = vmatprep.subr.bf16.mxu0 %v2383
      %2521 = vmatpush1.bf16.msra.mxu0 %v2382
      %2522 = vmatprep.subr.bf16.mxu0 %v2381
      %2523 = vmatpush1.bf16.msra.mxu0 %v2380
      %2524 = vmatprep.subr.bf16.mxu0 %v2411
      %2525 = vmatpush2.bf16.msra.mxu0 %v2410
      %2526 = vmatprep.subr.bf16.mxu0 %v2409
      %2527 = vmatpush2.bf16.msra.mxu0 %v2408
      %2528 = vmatprep.subr.bf16.mxu0 %v2407
      %2529 = vmatpush2.bf16.msra.mxu0 %v2406
      %2530 = vmatprep.subr.bf16.mxu0 %v2405
      %2531 = vmatpush2.bf16.msra.mxu0 %v2404
      %2532 = vmatprep.subr.bf16.mxu0 %v2403
      %2533 = vmatpush2.bf16.msra.mxu0 %v2402
      %2534 = vmatprep.subr.bf16.mxu0 %v2401
      %2535 = vmatpush2.bf16.msra.mxu0 %v2400
      %2536 = vmatprep.subr.bf16.mxu0 %v2399
      %2537 = vmatpush2.bf16.msra.mxu0 %v2398
      %2538 = vmatprep.subr.bf16.mxu0 %v2397
      %2539 = vmatpush2.bf16.msra.mxu0 %v2396
      %2540 = vmatprep.mubr.bf16.mxu0 %v2109
      %2541 = vmatmul.mubr.bf16.gmra.mxu0 %v2108
      %v2542 = vpop.f32.mrf.mxu0
      %v2543 = vadd.f32 %v2181, %v2542
      %v2544 = vpop.f32.mrf.mxu0
      %v2545 = vadd.f32 %v2185, %v2544
      %v2546 = vpop.f32.mrf.mxu0
      %v2547 = vpop.f32.mrf.mxu0
      %2548 = vdwg.mxu0
      %2549 = vmatprep.subr.bf16.mxu0 %v2427
      %2550 = vmatpush1.bf16.msra.mxu0 %v2426
      %2551 = vmatprep.subr.bf16.mxu0 %v2425
      %2552 = vmatpush1.bf16.msra.mxu0 %v2424
      %2553 = vmatprep.subr.bf16.mxu0 %v2423
      %2554 = vmatpush1.bf16.msra.mxu0 %v2422
      %2555 = vmatprep.subr.bf16.mxu0 %v2421
      %2556 = vmatpush1.bf16.msra.mxu0 %v2420
      %2557 = vmatprep.subr.bf16.mxu0 %v2419
      %2558 = vmatpush1.bf16.msra.mxu0 %v2418
      %2559 = vmatprep.subr.bf16.mxu0 %v2417
      %2560 = vmatpush1.bf16.msra.mxu0 %v2416
      %2561 = vmatprep.subr.bf16.mxu0 %v2415
      %2562 = vmatpush1.bf16.msra.mxu0 %v2414
      %2563 = vmatprep.subr.bf16.mxu0 %v2413
      %2564 = vmatpush1.bf16.msra.mxu0 %v2412
      %2565 = vmatprep.subr.bf16.mxu0 %v2443
      %2566 = vmatpush2.bf16.msra.mxu0 %v2442
      %2567 = vmatprep.subr.bf16.mxu0 %v2441
      %2568 = vmatpush2.bf16.msra.mxu0 %v2440
      %2569 = vmatprep.subr.bf16.mxu0 %v2439
      %2570 = vmatpush2.bf16.msra.mxu0 %v2438
      %2571 = vmatprep.subr.bf16.mxu0 %v2437
      %2572 = vmatpush2.bf16.msra.mxu0 %v2436
      %2573 = vmatprep.subr.bf16.mxu0 %v2435
      %2574 = vmatpush2.bf16.msra.mxu0 %v2434
      %2575 = vmatprep.subr.bf16.mxu0 %v2433
      %2576 = vmatpush2.bf16.msra.mxu0 %v2432
      %2577 = vmatprep.subr.bf16.mxu0 %v2431
      %2578 = vmatpush2.bf16.msra.mxu0 %v2430
      %2579 = vmatprep.subr.bf16.mxu0 %v2429
      %2580 = vmatpush2.bf16.msra.mxu0 %v2428
      %2581 = vmatprep.mubr.bf16.mxu0 %v2111
      %2582 = vmatmul.mubr.bf16.gmra.mxu0 %v2110
      %v2583 = vpop.f32.mrf.mxu0
      %v2584 = vadd.f32 %v2543, %v2583
      %v2585 = vpop.f32.mrf.mxu0
      %v2586 = vadd.f32 %v2545, %v2585
      %v2587 = vpop.f32.mrf.mxu0
      %v2588 = vpop.f32.mrf.mxu0
      %2589 = vdwg.mxu0
      %vm2590 = vcmp.gt.f32.partialorder %v2584, 0.0
      %vm2591 = vcmp.gt.f32.partialorder %v2586, 0.0
      %v2592 = vmul.f32 %v2584, 0.01
      %v2593 = vmul.f32 %v2586, 0.01
      %v2594 = vsel %vm2590, %v2584, %v2592
      %v2595 = vsel %vm2591, %v2586, %v2593
      %v2596 = vld [vmem:[%s5] sm:$0x3]
      %v2597 = vpack.c.bf16 %v2594, %v2594
      %v2598 = vpack.c.bf16 %v2595, %v2595
      %s2599 = sld [smem:[#allocation3]]
      %v2600 = vstv %s2599
      %v2603 = vunpack.c.l.s4 1966171168
      %v2604 = vunpack.c.0.s8 %v2603
      %v2605 = vlaneseq
      %v2606 = vshrl.u32 %v2605, 7
      %v2607 = vsub.s32 %v2604, %v2606
      %v2608 = vrot.slane %v2596, %v2607
      %v2609 = vcombine.high %v2608, %v2608
      %v2611 = vunpack.c.l.s4 1966171168
      %v2612 = vunpack.c.0.s8 %v2611
      %v2613 = vlaneseq
      %v2614 = vshrl.u32 %v2613, 7
      %v2615 = vsub.s32 %v2612, %v2614
      %v2616 = vrot.slane %v2608, %v2615
      %v2618 = vunpack.c.l.s4 1966171168
      %v2619 = vunpack.c.0.s8 %v2618
      %v2620 = vlaneseq
      %v2621 = vshrl.u32 %v2620, 7
      %v2622 = vsub.s32 %v2619, %v2621
      %v2623 = vrot.slane %v2609, %v2622
      %2626 = vmatprep.subr.bf16.mxu0 0
      %2627 = vmatpush1.bf16.xpose.msra.mxu0 0
      %2628 = vmatprep.subr.bf16.mxu0 0
      %2629 = vmatpush1.bf16.xpose.msra.mxu0 0
      %2630 = vmatprep.subr.bf16.mxu0 0
      %2631 = vmatpush1.bf16.xpose.msra.mxu0 0
      %2632 = vmatprep.subr.bf16.mxu0 0
      %2633 = vmatpush1.bf16.xpose.msra.mxu0 0
      %2634 = vmatprep.subr.bf16.mxu0 0
      %2635 = vmatpush1.bf16.xpose.msra.mxu0 0
      %2636 = vmatprep.subr.bf16.mxu0 0
      %2637 = vmatpush1.bf16.xpose.msra.mxu0 0
      %2638 = vmatprep.subr.bf16.mxu0 0
      %2639 = vmatpush1.bf16.xpose.msra.mxu0 0
      %2640 = vmatprep.subr.bf16.mxu0 %v2598
      %2641 = vmatpush1.bf16.xpose.msra.mxu0 %v2597
      %2642 = vmatprep.subr.bf16.mxu0 0
      %2643 = vmatpush2.bf16.xpose.msra.mxu0 0
      %2644 = vmatprep.subr.bf16.mxu0 0
      %2645 = vmatpush2.bf16.xpose.msra.mxu0 0
      %2646 = vmatprep.subr.bf16.mxu0 0
      %2647 = vmatpush2.bf16.xpose.msra.mxu0 0
      %2648 = vmatprep.subr.bf16.mxu0 0
      %2649 = vmatpush2.bf16.xpose.msra.mxu0 0
      %2650 = vmatprep.subr.bf16.mxu0 0
      %2651 = vmatpush2.bf16.xpose.msra.mxu0 0
      %2652 = vmatprep.subr.bf16.mxu0 0
      %2653 = vmatpush2.bf16.xpose.msra.mxu0 0
      %2654 = vmatprep.subr.bf16.mxu0 0
      %2655 = vmatpush2.bf16.xpose.msra.mxu0 0
      %2656 = vmatprep.subr.bf16.mxu0 0
      %2657 = vmatpush2.bf16.xpose.msra.mxu0 0
      %2658 = vmatprep.mubr.bf16.mxu0 %v2623
      %2659 = vmatmul.mubr.bf16.gmra.mxu0 %v2616
      %v2660 = vpop.f32.mrf.mxu0
      %v2661 = vadd.f32 %v2600, %v2660
      %v2662 = vpop.f32.mrf.mxu0
      %v2663 = vpop.f32.mrf.mxu0
      %v2664 = vpop.f32.mrf.mxu0
      %2665 = vdwg.mxu0
      %v2666 = vxor.u32 %v2661, 2147483648
      %v2667 = vmul.f32 %v2666, 1.442695
      %v2668 = vpow.pop %v2667
      %v2669 = vadd.f32 %v2668, 1.0
      %v2670 = vrcp.pop %v2669
      %v2671 = vmul.f32 1.0, %v2670
      %vm2672 = vcmask 8192
      %2673 = vst.msk [vmem:[#allocation10] sm:$0x1] %vm2672, %v2671
    $region53: #{tpu_custom_call.1} parent=1 // pred_fallthru
      _
    // Predicated region
    $region54: #{tpu_custom_call.1} parent=1 // pred_check
      _
    $region55: #{tpu_custom_call.1} parent=1 // pred_check_branch
      %2675 = sbr.rel (0) target = $region57
    $region56: #{tpu_custom_call.1} parent=1 // pred_region
      %s2677 = ssub.s32 16, 16
      %2678 = vsyncadd [#allocation6], %s2677
      %s2680 = sshll.u32 [#allocation10], 4
      %s2681 = int_to_ptr.vmem [resolvable:$true] %s2680
      %2683 = dma.vmem_to_hbm [thread:$0]  %s2681, 16, %s7, [#allocation6]
    $region57: #{tpu_custom_call.1} parent=1 // pred_fallthru
      _
    // Predicated region
    $region58: #{tpu_custom_call.1} parent=1 // pred_check
      _
    $region59: #{tpu_custom_call.1} parent=1 // pred_check_branch
      %2685 = sbr.rel (0) target = $region61
    $region60: #{tpu_custom_call.1} parent=1 // pred_region
      %2686 = dma.done [#allocation6], 16
    $region61: #{tpu_custom_call.1} parent=1 // pred_fallthru
      _
    %2687 = vsyncpa [#allocation5], 1
    %2688 = vsyncpa [#allocation8], 1
    %2689 = vsyncpa [#allocation6], 1

</llo_original>
